<compile_context>
chip_gen: v5e
topology: v5e:2x2
jax: 0.10.0
libtpu: 0.0.40
codegen_flags: <defaults>
</compile_context>

<pallas_src>
import math

import jax
import jax.numpy as jnp
from jax.experimental import pallas as pl
from jax.experimental.pallas import tpu as pltpu


def _disc_kernel(xT_ref,
                 w1_ref, b1_ref,
                 w2_ref, b2_ref,
                 w3_ref, b3_ref,
                 w4_ref, b4_ref,
                 o_ref):
    # Layer 1 (in=2): VPU broadcast-FMAs. Elementwise dtype follows x/w1/b1
    # (bf16 on v6e/v7x -> half the VALU bundles on the biggest 256xTB region
    #  and no separate cast before the layer-2 MXU push; f32 on v5e).
    xT = xT_ref[...]                                            # (2, TB), batch on lanes
    h1 = (w1_ref[:, 0:1] * xT[0:1, :]
          + w1_ref[:, 1:2] * xT[1:2, :]
          + b1_ref[...])                                        # (256, TB)
    h1 = jnp.maximum(h1, 0.0)                                   # ReLU; Dropout = identity (eval)
    h1 = h1.astype(jnp.bfloat16)                                # no-op on the bf16 path

    # Layer 2: 256 -> 128 on the MXU, bf16 inputs, f32 accumulation.
    h2 = jnp.dot(w2_ref[...], h1,
                 preferred_element_type=jnp.float32) + b2_ref[...]   # (128, TB) f32
    h2 = jnp.maximum(h2, 0.0).astype(jnp.bfloat16)

    # Layer 3: 128 -> 64 on the MXU.
    h3 = jnp.dot(w3_ref[...], h2,
                 preferred_element_type=jnp.float32) + b3_ref[...]   # (64, TB) f32
    h3 = jnp.maximum(h3, 0.0)

    # Layer 4 (out=1): VPU multiply + sublane (XLU) reduction -> lane-dense (1, TB).
    z = jnp.sum(w4_ref[...] * h3, axis=0, keepdims=True) + b4_ref[...]

    # Sigmoid: exp + approximate reciprocal both land on the EUP slot.
    o_ref[...] = pl.reciprocal(1.0 + jnp.exp(-z), approx=True)


def _pick_tile(padded_b):
    """padded_b is a multiple of 128. Prefer the largest lane-aligned tile that
    still yields >= 2 grid steps (so v7x's two TensorCores both get work);
    cap at 4096 so live intermediates stay well under every generation's VMEM."""
    for cand in (4096, 2048, 1024, 512, 256, 128):
        if padded_b % cand == 0 and padded_b // cand >= 2:
            return cand
    return 128  # padded_b == 128: single step, unavoidable


def _use_bf16_elementwise():
    """bf16 VALU exists on v6e/v7x only; keep v5e (and older) on f32 elementwise."""
    try:
        kind = jax.devices()[0].device_kind.lower()
    except Exception:
        return False
    return ("v6" in kind) or ("v7" in kind)


def make_discriminator(params, *, use_bf16=None, tile_b=None):
    """Build a jitted forward fn: x (B, 2) f32 -> (B, 1) f32.

    Weight casts happen exactly once here (not per call); the per-call wrapper
    work (transpose of the tiny (B,2) input, pad, cast) is fused under jit.
    """
    if use_bf16 is None:
        use_bf16 = _use_bf16_elementwise()
    ew_dtype = jnp.bfloat16 if use_bf16 else jnp.float32

    # One-time casts (MXU-native bf16 for the two real matmul weights on all
    # generations; bf16 layer-1/bias only where the VPU supports it).
    w1 = params["w1"].astype(ew_dtype)
    b1 = params["b1"].astype(ew_dtype)
    w2 = params["w2"].astype(jnp.bfloat16)
    b2 = params["b2"].astype(jnp.float32)
    w3 = params["w3"].astype(jnp.bfloat16)
    b3 = params["b3"].astype(jnp.float32)
    w4 = params["w4"].astype(jnp.float32)
    b4 = params["b4"].astype(jnp.float32)

    weight_bytes = sum(int(a.size) * a.dtype.itemsize
                       for a in (w1, b1, w2, b2, w3, b3, w4, b4))

    full = lambda a: pl.BlockSpec(a.shape, lambda i: (0, 0))

    @jax.jit
    def forward(x):
        B, F = x.shape
        assert F == 2
        padded_b = pl.cdiv(B, 128) * 128                 # static under jit
        tb = tile_b if tile_b is not None else _pick_tile(padded_b)
        assert padded_b % tb == 0 and tb % 128 == 0

        xT = x.T.astype(ew_dtype)                        # (2, B): batch along lanes
        if padded_b != B:
            xT = jnp.pad(xT, ((0, 0), (0, padded_b - B)))

        cost = pl.CostEstimate(
            flops=2 * padded_b * (2 * 256 + 256 * 128 + 128 * 64 + 64),
            transcendentals=2 * padded_b,
            bytes_accessed=int(xT.size) * xT.dtype.itemsize + padded_b * 4 + weight_bytes,
        )

        out = pl.pallas_call(
            _disc_kernel,
            out_shape=jax.ShapeDtypeStruct((1, padded_b), jnp.float32),
            grid=(padded_b // tb,),
            in_specs=[
                pl.BlockSpec((2, tb), lambda i: (0, i)),          # x tile (batch on lanes)
                full(w1), full(b1),
                full(w2), full(b2),
                full(w3), full(b3),
                full(w4), full(b4),
            ],
            out_specs=pl.BlockSpec((1, tb), lambda i: (0, i)),    # lane-dense output row
            compiler_params=pltpu.CompilerParams(
                dimension_semantics=("parallel",),                # >=2 steps -> v7x 2-TC sharding
                vmem_limit_bytes=32 * 1024 * 1024,                # covers tb=4096 even on v5e
            ),
            cost_estimate=cost,
        )(xT, w1, b1, w2, b2, w3, b3, w4, b4)

        return out[0, :B].reshape(B, 1)

    return forward


def init_params(key):
    """Deterministic init mimicking PyTorch nn.Linear default (U[-1/sqrt(fan_in), +])."""
    dims = [(2, 256), (256, 128), (128, 64), (64, 1)]
    params = {}
    for idx, (fan_in, fan_out) in enumerate(dims, start=1):
        key, kw, kb = jax.random.split(key, 3)
        bound = 1.0 / math.sqrt(fan_in)
        if idx == 4:
            w_shape = (fan_in, fan_out)       # (64, 1) column: consumed by the VPU reduction
        else:
            w_shape = (fan_out, fan_in)       # PyTorch (out, in) orientation: y^T = W @ x^T
        params[f"w{idx}"] = jax.random.uniform(kw, w_shape, jnp.float32, -bound, bound)
        params[f"b{idx}"] = jax.random.uniform(kb, (fan_out, 1), jnp.float32, -bound, bound)
    return params


if __name__ == "__main__":
    key = jax.random.PRNGKey(0)
    kx, kp = jax.random.split(key)

    # B=300 is deliberately NOT a multiple of 128: exercises zero-padding to 384
    # and a 3-step parallel grid (tile_b=128).
    B = 300
    x = jax.random.normal(kx, (B, 2), jnp.float32)
    params = init_params(kp)

    forward = make_discriminator(params)
    out = jax.block_until_ready(forward(x))

    # Pure-JAX f32 reference (eval-mode dropout = identity). The kernel may run
    # bf16 matmul inputs / bf16 layer-1 (v6e/v7x) plus an approximate reciprocal
    # in the sigmoid, so compare with a tolerance that covers that drift.
    hT = jnp.maximum(params["w1"] @ x.T + params["b1"], 0.0)                    # (256, B)
    hT = jnp.maximum(params["w2"] @ hT + params["b2"], 0.0)                     # (128, B)
    hT = jnp.maximum(params["w3"] @ hT + params["b3"], 0.0)                     # (64, B)
    z = jnp.sum(params["w4"] * hT, axis=0, keepdims=True) + params["b4"]        # (1, B)
    ref = jax.nn.sigmoid(z).reshape(B, 1)

    assert out.shape == (B, 1)
    err = float(jnp.max(jnp.abs(out - ref)))
    assert err < 2e-2, err

    print("KERNEL_OK")
</pallas_src>

<mosaic_0001>
module attributes {stable_mosaic.version = 11 : i64} {
  func.func @_disc_kernel(%arg0: i32, %arg1: memref<2x128xf32, #tpu.memory_space<vmem>>, %arg2: memref<256x2xf32, #tpu.memory_space<vmem>>, %arg3: memref<256x1xf32, #tpu.memory_space<vmem>>, %arg4: memref<128x256xbf16, #tpu.memory_space<vmem>>, %arg5: memref<128x1xf32, #tpu.memory_space<vmem>>, %arg6: memref<64x128xbf16, #tpu.memory_space<vmem>>, %arg7: memref<64x1xf32, #tpu.memory_space<vmem>>, %arg8: memref<64x1xf32, #tpu.memory_space<vmem>>, %arg9: memref<1x1xf32, #tpu.memory_space<vmem>>, %arg10: memref<1x128xf32, #tpu.memory_space<vmem>>) attributes {dimension_semantics = [#tpu.dimension_semantics<parallel>], iteration_bounds = array<i64: 3>, scalar_prefetch = 0 : i64, scratch_operands = 0 : i64, tpu.core_type = #tpu.core_type<tc>, window_params = [{transform_indices = @transform_0, window_bounds = array<i64: 2, 128>}, {pipeline_mode = #tpu.pipeline_mode<synchronous>, transform_indices = @transform_1, window_bounds = array<i64: 256, 2>}, {pipeline_mode = #tpu.pipeline_mode<synchronous>, transform_indices = @transform_2, window_bounds = array<i64: 256, 1>}, {pipeline_mode = #tpu.pipeline_mode<synchronous>, transform_indices = @transform_3, window_bounds = array<i64: 128, 256>}, {pipeline_mode = #tpu.pipeline_mode<synchronous>, transform_indices = @transform_4, window_bounds = array<i64: 128, 1>}, {pipeline_mode = #tpu.pipeline_mode<synchronous>, transform_indices = @transform_5, window_bounds = array<i64: 64, 128>}, {pipeline_mode = #tpu.pipeline_mode<synchronous>, transform_indices = @transform_6, window_bounds = array<i64: 64, 1>}, {pipeline_mode = #tpu.pipeline_mode<synchronous>, transform_indices = @transform_7, window_bounds = array<i64: 64, 1>}, {pipeline_mode = #tpu.pipeline_mode<synchronous>, transform_indices = @transform_8, window_bounds = array<i64: 1, 1>}, {transform_indices = @transform_9, window_bounds = array<i64: 1, 128>}]} {
    %c0 = arith.constant 0 : index
    %c0_0 = arith.constant 0 : index
    %0 = vector.load %arg1[%c0, %c0_0] : memref<2x128xf32, #tpu.memory_space<vmem>>, vector<2x128xf32>
    %c0_1 = arith.constant 0 : index
    %c0_2 = arith.constant 0 : index
    %1 = vector.load %arg2[%c0_1, %c0_2] : memref<256x2xf32, #tpu.memory_space<vmem>>, vector<256x1xf32>
    %2 = vector.extract_strided_slice %0 {offsets = [0, 0], sizes = [1, 128], strides = [1, 1]} : vector<2x128xf32> to vector<1x128xf32>
    %3 = vector.broadcast %1 : vector<256x1xf32> to vector<256x128xf32>
    %4 = vector.broadcast %2 : vector<1x128xf32> to vector<256x128xf32>
    %5 = arith.mulf %3, %4 : vector<256x128xf32>
    %c0_3 = arith.constant 0 : index
    %c1 = arith.constant 1 : index
    %6 = vector.load %arg2[%c0_3, %c1] : memref<256x2xf32, #tpu.memory_space<vmem>>, vector<256x1xf32>
    %7 = vector.extract_strided_slice %0 {offsets = [1, 0], sizes = [1, 128], strides = [1, 1]} : vector<2x128xf32> to vector<1x128xf32>
    %8 = vector.broadcast %6 : vector<256x1xf32> to vector<256x128xf32>
    %9 = vector.broadcast %7 : vector<1x128xf32> to vector<256x128xf32>
    %10 = arith.mulf %8, %9 : vector<256x128xf32>
    %11 = arith.addf %5, %10 : vector<256x128xf32>
    %c0_4 = arith.constant 0 : index
    %c0_5 = arith.constant 0 : index
    %12 = vector.load %arg3[%c0_4, %c0_5] : memref<256x1xf32, #tpu.memory_space<vmem>>, vector<256x1xf32>
    %13 = vector.broadcast %12 : vector<256x1xf32> to vector<256x128xf32>
    %14 = arith.addf %11, %13 : vector<256x128xf32>
    %cst = arith.constant 0.000000e+00 : f32
    %15 = vector.broadcast %cst : f32 to vector<256x128xf32>
    %16 = arith.maximumf %14, %15 : vector<256x128xf32>
    %17 = arith.truncf %16 : vector<256x128xf32> to vector<256x128xbf16>
    %c0_6 = arith.constant 0 : index
    %c0_7 = arith.constant 0 : index
    %18 = vector.load %arg4[%c0_6, %c0_7] : memref<128x256xbf16, #tpu.memory_space<vmem>>, vector<128x256xbf16>
    %cst_8 = arith.constant dense<0.000000e+00> : vector<128x128xf32>
    %19 = tpu.matmul %18, %17, %cst_8 {dimension_numbers = #tpu.dot_dimension_numbers<[1], [0], [0], [1], [0, 0, 1, 1], [], []>} : vector<128x256xbf16>, vector<256x128xbf16>, vector<128x128xf32> -> vector<128x128xf32>
    %c0_9 = arith.constant 0 : index
    %c0_10 = arith.constant 0 : index
    %20 = vector.load %arg5[%c0_9, %c0_10] : memref<128x1xf32, #tpu.memory_space<vmem>>, vector<128x1xf32>
    %21 = vector.broadcast %20 : vector<128x1xf32> to vector<128x128xf32>
    %22 = arith.addf %19, %21 : vector<128x128xf32>
    %cst_11 = arith.constant 0.000000e+00 : f32
    %23 = vector.broadcast %cst_11 : f32 to vector<128x128xf32>
    %24 = arith.maximumf %22, %23 : vector<128x128xf32>
    %25 = arith.truncf %24 : vector<128x128xf32> to vector<128x128xbf16>
    %c0_12 = arith.constant 0 : index
    %c0_13 = arith.constant 0 : index
    %26 = vector.load %arg6[%c0_12, %c0_13] : memref<64x128xbf16, #tpu.memory_space<vmem>>, vector<64x128xbf16>
    %cst_14 = arith.constant dense<0.000000e+00> : vector<64x128xf32>
    %27 = tpu.matmul %26, %25, %cst_14 {dimension_numbers = #tpu.dot_dimension_numbers<[1], [0], [0], [1], [0, 0, 1, 1], [], []>} : vector<64x128xbf16>, vector<128x128xbf16>, vector<64x128xf32> -> vector<64x128xf32>
    %c0_15 = arith.constant 0 : index
    %c0_16 = arith.constant 0 : index
    %28 = vector.load %arg7[%c0_15, %c0_16] : memref<64x1xf32, #tpu.memory_space<vmem>>, vector<64x1xf32>
    %29 = vector.broadcast %28 : vector<64x1xf32> to vector<64x128xf32>
    %30 = arith.addf %27, %29 : vector<64x128xf32>
    %cst_17 = arith.constant 0.000000e+00 : f32
    %31 = vector.broadcast %cst_17 : f32 to vector<64x128xf32>
    %32 = arith.maximumf %30, %31 : vector<64x128xf32>
    %c0_18 = arith.constant 0 : index
    %c0_19 = arith.constant 0 : index
    %33 = vector.load %arg8[%c0_18, %c0_19] : memref<64x1xf32, #tpu.memory_space<vmem>>, vector<64x1xf32>
    %34 = vector.broadcast %33 : vector<64x1xf32> to vector<64x128xf32>
    %35 = arith.mulf %34, %32 : vector<64x128xf32>
    %cst_20 = arith.constant dense<0.000000e+00> : vector<128xf32>
    %36 = vector.multi_reduction <add>, %35, %cst_20 [0] : vector<64x128xf32> to vector<128xf32>
    %37 = vector.shape_cast %36 : vector<128xf32> to vector<1x128xf32>
    %c0_21 = arith.constant 0 : index
    %c0_22 = arith.constant 0 : index
    %38 = vector.load %arg9[%c0_21, %c0_22] : memref<1x1xf32, #tpu.memory_space<vmem>>, vector<1x1xf32>
    %39 = vector.broadcast %38 : vector<1x1xf32> to vector<1x128xf32>
    %40 = arith.addf %37, %39 : vector<1x128xf32>
    %cst_23 = arith.constant 0.000000e+00 : f32
    %41 = vector.broadcast %cst_23 : f32 to vector<1x128xf32>
    %42 = arith.subf %41, %40 : vector<1x128xf32>
    %43 = math.exp %42 : vector<1x128xf32>
    %cst_24 = arith.constant 1.000000e+00 : f32
    %44 = vector.broadcast %cst_24 : f32 to vector<1x128xf32>
    %45 = arith.addf %44, %43 : vector<1x128xf32>
    %46 = tpu.reciprocal %45 {approx = true} : vector<1x128xf32> -> vector<1x128xf32>
    %c0_25 = arith.constant 0 : index
    %c0_26 = arith.constant 0 : index
    %47 = vector.load %arg10[%c0_25, %c0_26] : memref<1x128xf32, #tpu.memory_space<vmem>>, vector<1x128xf32>
    tpu.vector_store %arg10[%c0_25, %c0_26], %46 {strides = array<i32>} : memref<1x128xf32, #tpu.memory_space<vmem>>, vector<1x128xf32>,
    return
  }
  func.func @transform_0(%arg0: i32) -> (i32, i32) {
    %c0_i32 = arith.constant 0 : i32
    %c0_i32_0 = arith.constant 0 : i32
    return %c0_i32, %arg0 : i32, i32
  }
  func.func @transform_1(%arg0: i32) -> (i32, i32) {
    %c0_i32 = arith.constant 0 : i32
    %c0_i32_0 = arith.constant 0 : i32
    %c0_i32_1 = arith.constant 0 : i32
    return %c0_i32, %c0_i32_0 : i32, i32
  }
  func.func @transform_2(%arg0: i32) -> (i32, i32) {
    %c0_i32 = arith.constant 0 : i32
    %c0_i32_0 = arith.constant 0 : i32
    %c0_i32_1 = arith.constant 0 : i32
    return %c0_i32, %c0_i32_0 : i32, i32
  }
  func.func @transform_3(%arg0: i32) -> (i32, i32) {
    %c0_i32 = arith.constant 0 : i32
    %c0_i32_0 = arith.constant 0 : i32
    %c0_i32_1 = arith.constant 0 : i32
    return %c0_i32, %c0_i32_0 : i32, i32
  }
  func.func @transform_4(%arg0: i32) -> (i32, i32) {
    %c0_i32 = arith.constant 0 : i32
    %c0_i32_0 = arith.constant 0 : i32
    %c0_i32_1 = arith.constant 0 : i32
    return %c0_i32, %c0_i32_0 : i32, i32
  }
  func.func @transform_5(%arg0: i32) -> (i32, i32) {
    %c0_i32 = arith.constant 0 : i32
    %c0_i32_0 = arith.constant 0 : i32
    %c0_i32_1 = arith.constant 0 : i32
    return %c0_i32, %c0_i32_0 : i32, i32
  }
  func.func @transform_6(%arg0: i32) -> (i32, i32) {
    %c0_i32 = arith.constant 0 : i32
    %c0_i32_0 = arith.constant 0 : i32
    %c0_i32_1 = arith.constant 0 : i32
    return %c0_i32, %c0_i32_0 : i32, i32
  }
  func.func @transform_7(%arg0: i32) -> (i32, i32) {
    %c0_i32 = arith.constant 0 : i32
    %c0_i32_0 = arith.constant 0 : i32
    %c0_i32_1 = arith.constant 0 : i32
    return %c0_i32, %c0_i32_0 : i32, i32
  }
  func.func @transform_8(%arg0: i32) -> (i32, i32) {
    %c0_i32 = arith.constant 0 : i32
    %c0_i32_0 = arith.constant 0 : i32
    %c0_i32_1 = arith.constant 0 : i32
    return %c0_i32, %c0_i32_0 : i32, i32
  }
  func.func @transform_9(%arg0: i32) -> (i32, i32) {
    %c0_i32 = arith.constant 0 : i32
    %c0_i32_0 = arith.constant 0 : i32
    return %c0_i32, %arg0 : i32, i32
  }
}

</mosaic_0001>

<llo_original>
// kernel: forward.1
$region0: #{forward.1}
  #allocation0 [shape = 'u32[]', space=smem, size = 0x4, offset = 0x4, fixed_abs, tag = 'smem constant byte address 0x4 - core index']
  #allocation1 [shape = 'u32[72,128]{1,0:T(1,128)}', space=vmem, size = 0x9000, scoped, tag = 'internal scratch']
  #allocation2 [shape = 'f32[1,1]{1,0:T(1,128)S(1)}', space=vmem, size = 0x200, scoped, tag = 'scoped memory for forward.1']
  %s0 = inlined_call_operand.vmem [shape: f32[2,384], index: 0, kind: input, shape index: {}]
  %s1 = inlined_call_operand.hbm [shape: f32[256,2], index: 1, kind: input, shape index: {}]
  %s2 = inlined_call_operand.hbm [shape: f32[256,1], index: 2, kind: input, shape index: {}]
  %s3 = inlined_call_operand.hbm [shape: bf16[128,256], index: 3, kind: input, shape index: {}]
  %s4 = inlined_call_operand.hbm [shape: f32[128,1], index: 4, kind: input, shape index: {}]
  %s5 = inlined_call_operand.hbm [shape: bf16[64,128], index: 5, kind: input, shape index: {}]
  %s6 = inlined_call_operand.hbm [shape: f32[64,1], index: 6, kind: input, shape index: {}]
  %s7 = inlined_call_operand.hbm [shape: f32[64,1], index: 7, kind: input, shape index: {}]
  %s8 = inlined_call_operand.<no memory space> [shape: f32[1,1], index: 8, kind: input, shape index: {}]
  %s9 = inlined_call_operand.vmem [shape: f32[1,384], index: 9, kind: output, shape index: {}]
  %s10 = sld [smem:[#allocation0]]
  $region97: #{forward.1} parent=0
    _
  %s12 = ssub.s32 1, %s10
  %s13 = scalar_select 0, %s12, %s10
  %v14 = vstv %s8
  %15 = vst [vmem:[#allocation2] sm:$0x1] %v14
  $region1: #{forward.1} parent=0
    #allocation3 [shape = 'u8[131072]{0}', space=vmem, size = 0x20000, scoped, tag = 'input window, operand 1, single buffered']
    #allocation4 [shape = 's32[2]{0}', space=sflag, size = 0x8, scoped, tag = 'scoped memory for forward.1']
    #allocation5 [shape = 'u8[131072]{0}', space=vmem, size = 0x20000, scoped, tag = 'input window, operand 2, single buffered']
    #allocation6 [shape = 's32[1]{0}', space=sflag, size = 0x4, scoped, tag = 'scoped memory for forward.1']
    #allocation7 [shape = 'u8[65536]{0}', space=vmem, size = 0x10000, scoped, tag = 'input window, operand 3, single buffered']
    #allocation8 [shape = 'u8[65536]{0}', space=vmem, size = 0x10000, scoped, tag = 'input window, operand 4, single buffered']
    #allocation9 [shape = 's32[1]{0}', space=sflag, size = 0x4, scoped, tag = 'scoped memory for forward.1']
    #allocation10 [shape = 'u8[16384]{0}', space=vmem, size = 0x4000, scoped, tag = 'input window, operand 5, single buffered']
    #allocation11 [shape = 'u8[32768]{0}', space=vmem, size = 0x8000, scoped, tag = 'input window, operand 6, single buffered']
    #allocation12 [shape = 's32[1]{0}', space=sflag, size = 0x4, scoped, tag = 'scoped memory for forward.1']
    #allocation13 [shape = 'u8[32768]{0}', space=vmem, size = 0x8000, scoped, tag = 'input window, operand 7, single buffered']
    %16 = vsyncpa [#allocation4], 0
    %17 = vsyncpa [#allocation6], 0
    %18 = vsyncpa [#allocation9], 0
    %19 = vsyncpa [#allocation12], 0
    loop: start=0, step=1, limit=5
    $region2: #{forward.1} parent=1 // loop_pre_header
      _
    $region3: #{forward.1} parent=1 // loop_header
      %s21 = sphi 0, %s25
      %p22 = scmp.ge.s32.totalorder %s21, 5
      %s31 = sphi 0, %s33
      %s34 = sphi 0, %s31
      %s35 = sphi 0, %s34
      %s51 = sphi 0, %s35
      %s55 = sphi 0, %s55
      %s57 = sphi 0, %s55
      %s58 = sphi 0, %s57
      %s72 = sphi 0, %s58
      %s76 = sphi 0, %s76
      %s78 = sphi 0, %s76
      %s79 = sphi 0, %s78
      %s93 = sphi 0, %s79
      %s97 = sphi 0, %s97
      %s99 = sphi 0, %s97
      %s100 = sphi 0, %s99
      %s114 = sphi 0, %s100
      %s118 = sphi 0, %s118
      %s120 = sphi 0, %s118
      %s121 = sphi 0, %s120
      %s135 = sphi 0, %s121
      %s139 = sphi 0, %s139
      %s141 = sphi 0, %s139
      %s142 = sphi 0, %s141
      %s156 = sphi 0, %s142
      %s160 = sphi 0, %s160
      %s162 = sphi 0, %s160
      %s163 = sphi 0, %s162
      %s177 = sphi 0, %s163
      %s181 = sphi 0, %s181
      %s183 = sphi 0, %s181
      %s184 = sphi 0, %s183
      %s198 = sphi 0, %s184
      %s202 = sphi 0, %s202
      %s204 = sphi 0, %s202
      %s205 = sphi 0, %s204
      %s219 = sphi 0, %s205
      %s225 = sphi 0, %s227
      %s228 = sphi 0, %s225
      %s229 = sphi 0, %s228
      %s245 = sphi 0, %s229
    $region4: #{forward.1} parent=1 // loop_header_branch
      %24 = sbr.rel (%p22) target = $region8
    $region5: #{forward.1} parent=1 // loop_body
      %s26 = ssub.s32 %s21, 1
      %s27 = ssub.s32 %s21, 2
      %s28 = sadd.s32 %s21, 1
      %s29 = ssub.s32 %s21, %s28
      %p30 = scmp.eq.s32.totalorder %s29, 0
      %s32 = sadd.s32 %s31, 1
      %s33 = scalar_select %p30, %s31, %s32
      %p36 = pneg %p30
      %p37 = scmp.eq.s32.totalorder %s21, 2
      %p38 = por %p36, %p37
      %p39 = scmp.ne.s32.totalorder %s31, %s34
      %p40 = scmp.eq.s32.totalorder %s21, 0
      %p41 = por %p39, %p40
      %p42 = scmp.ne.s32.totalorder %s31, %s34
      %p43 = scmp.eq.s32.totalorder %s26, 2
      %p44 = por %p42, %p43
      %p45 = scmp.ne.s32.totalorder %s34, %s35
      %p46 = scmp.eq.s32.totalorder %s26, 0
      %p47 = por %p45, %p46
      %p48 = scmp.ne.s32.totalorder %s34, %s35
      %p49 = scmp.eq.s32.totalorder %s27, 2
      %p50 = por %p48, %p49
      %p52 = scmp.ne.s32.totalorder %s35, %s51
      %p53 = scmp.eq.s32.totalorder %s27, 0
      %p54 = por %p52, %p53
      %s56 = sadd.s32 %s55, 1
      %p59 = scmp.eq.s32.totalorder %s21, 2
      %p60 = scmp.ne.s32.totalorder %s55, %s57
      %p61 = scmp.eq.s32.totalorder %s21, 0
      %p62 = por %p60, %p61
      %p63 = scmp.ne.s32.totalorder %s55, %s57
      %p64 = scmp.eq.s32.totalorder %s26, 2
      %p65 = por %p63, %p64
      %p66 = scmp.ne.s32.totalorder %s57, %s58
      %p67 = scmp.eq.s32.totalorder %s26, 0
      %p68 = por %p66, %p67
      %p69 = scmp.ne.s32.totalorder %s57, %s58
      %p70 = scmp.eq.s32.totalorder %s27, 2
      %p71 = por %p69, %p70
      %p73 = scmp.ne.s32.totalorder %s58, %s72
      %p74 = scmp.eq.s32.totalorder %s27, 0
      %p75 = por %p73, %p74
      %s77 = sadd.s32 %s76, 1
      %p80 = scmp.eq.s32.totalorder %s21, 2
      %p81 = scmp.ne.s32.totalorder %s76, %s78
      %p82 = scmp.eq.s32.totalorder %s21, 0
      %p83 = por %p81, %p82
      %p84 = scmp.ne.s32.totalorder %s76, %s78
      %p85 = scmp.eq.s32.totalorder %s26, 2
      %p86 = por %p84, %p85
      %p87 = scmp.ne.s32.totalorder %s78, %s79
      %p88 = scmp.eq.s32.totalorder %s26, 0
      %p89 = por %p87, %p88
      %p90 = scmp.ne.s32.totalorder %s78, %s79
      %p91 = scmp.eq.s32.totalorder %s27, 2
      %p92 = por %p90, %p91
      %p94 = scmp.ne.s32.totalorder %s79, %s93
      %p95 = scmp.eq.s32.totalorder %s27, 0
      %p96 = por %p94, %p95
      %s98 = sadd.s32 %s97, 1
      %p101 = scmp.eq.s32.totalorder %s21, 2
      %p102 = scmp.ne.s32.totalorder %s97, %s99
      %p103 = scmp.eq.s32.totalorder %s21, 0
      %p104 = por %p102, %p103
      %p105 = scmp.ne.s32.totalorder %s97, %s99
      %p106 = scmp.eq.s32.totalorder %s26, 2
      %p107 = por %p105, %p106
      %p108 = scmp.ne.s32.totalorder %s99, %s100
      %p109 = scmp.eq.s32.totalorder %s26, 0
      %p110 = por %p108, %p109
      %p111 = scmp.ne.s32.totalorder %s99, %s100
      %p112 = scmp.eq.s32.totalorder %s27, 2
      %p113 = por %p111, %p112
      %p115 = scmp.ne.s32.totalorder %s100, %s114
      %p116 = scmp.eq.s32.totalorder %s27, 0
      %p117 = por %p115, %p116
      %s119 = sadd.s32 %s118, 1
      %p122 = scmp.eq.s32.totalorder %s21, 2
      %p123 = scmp.ne.s32.totalorder %s118, %s120
      %p124 = scmp.eq.s32.totalorder %s21, 0
      %p125 = por %p123, %p124
      %p126 = scmp.ne.s32.totalorder %s118, %s120
      %p127 = scmp.eq.s32.totalorder %s26, 2
      %p128 = por %p126, %p127
      %p129 = scmp.ne.s32.totalorder %s120, %s121
      %p130 = scmp.eq.s32.totalorder %s26, 0
      %p131 = por %p129, %p130
      %p132 = scmp.ne.s32.totalorder %s120, %s121
      %p133 = scmp.eq.s32.totalorder %s27, 2
      %p134 = por %p132, %p133
      %p136 = scmp.ne.s32.totalorder %s121, %s135
      %p137 = scmp.eq.s32.totalorder %s27, 0
      %p138 = por %p136, %p137
      %s140 = sadd.s32 %s139, 1
      %p143 = scmp.eq.s32.totalorder %s21, 2
      %p144 = scmp.ne.s32.totalorder %s139, %s141
      %p145 = scmp.eq.s32.totalorder %s21, 0
      %p146 = por %p144, %p145
      %p147 = scmp.ne.s32.totalorder %s139, %s141
      %p148 = scmp.eq.s32.totalorder %s26, 2
      %p149 = por %p147, %p148
      %p150 = scmp.ne.s32.totalorder %s141, %s142
      %p151 = scmp.eq.s32.totalorder %s26, 0
      %p152 = por %p150, %p151
      %p153 = scmp.ne.s32.totalorder %s141, %s142
      %p154 = scmp.eq.s32.totalorder %s27, 2
      %p155 = por %p153, %p154
      %p157 = scmp.ne.s32.totalorder %s142, %s156
      %p158 = scmp.eq.s32.totalorder %s27, 0
      %p159 = por %p157, %p158
      %s161 = sadd.s32 %s160, 1
      %p164 = scmp.eq.s32.totalorder %s21, 2
      %p165 = scmp.ne.s32.totalorder %s160, %s162
      %p166 = scmp.eq.s32.totalorder %s21, 0
      %p167 = por %p165, %p166
      %p168 = scmp.ne.s32.totalorder %s160, %s162
      %p169 = scmp.eq.s32.totalorder %s26, 2
      %p170 = por %p168, %p169
      %p171 = scmp.ne.s32.totalorder %s162, %s163
      %p172 = scmp.eq.s32.totalorder %s26, 0
      %p173 = por %p171, %p172
      %p174 = scmp.ne.s32.totalorder %s162, %s163
      %p175 = scmp.eq.s32.totalorder %s27, 2
      %p176 = por %p174, %p175
      %p178 = scmp.ne.s32.totalorder %s163, %s177
      %p179 = scmp.eq.s32.totalorder %s27, 0
      %p180 = por %p178, %p179
      %s182 = sadd.s32 %s181, 1
      %p185 = scmp.eq.s32.totalorder %s21, 2
      %p186 = scmp.ne.s32.totalorder %s181, %s183
      %p187 = scmp.eq.s32.totalorder %s21, 0
      %p188 = por %p186, %p187
      %p189 = scmp.ne.s32.totalorder %s181, %s183
      %p190 = scmp.eq.s32.totalorder %s26, 2
      %p191 = por %p189, %p190
      %p192 = scmp.ne.s32.totalorder %s183, %s184
      %p193 = scmp.eq.s32.totalorder %s26, 0
      %p194 = por %p192, %p193
      %p195 = scmp.ne.s32.totalorder %s183, %s184
      %p196 = scmp.eq.s32.totalorder %s27, 2
      %p197 = por %p195, %p196
      %p199 = scmp.ne.s32.totalorder %s184, %s198
      %p200 = scmp.eq.s32.totalorder %s27, 0
      %p201 = por %p199, %p200
      %s203 = sadd.s32 %s202, 1
      %p206 = scmp.eq.s32.totalorder %s21, 2
      %p207 = scmp.ne.s32.totalorder %s202, %s204
      %p208 = scmp.eq.s32.totalorder %s21, 0
      %p209 = por %p207, %p208
      %p210 = scmp.ne.s32.totalorder %s202, %s204
      %p211 = scmp.eq.s32.totalorder %s26, 2
      %p212 = por %p210, %p211
      %p213 = scmp.ne.s32.totalorder %s204, %s205
      %p214 = scmp.eq.s32.totalorder %s26, 0
      %p215 = por %p213, %p214
      %p216 = scmp.ne.s32.totalorder %s204, %s205
      %p217 = scmp.eq.s32.totalorder %s27, 2
      %p218 = por %p216, %p217
      %p220 = scmp.ne.s32.totalorder %s205, %s219
      %p221 = scmp.eq.s32.totalorder %s27, 0
      %p222 = por %p220, %p221
      %s223 = ssub.s32 %s21, %s28
      %p224 = scmp.eq.s32.totalorder %s223, 0
      %s226 = sadd.s32 %s225, 1
      %s227 = scalar_select %p224, %s225, %s226
      %p230 = pneg %p224
      %p231 = scmp.eq.s32.totalorder %s21, 2
      %p232 = por %p230, %p231
      %p233 = scmp.ne.s32.totalorder %s225, %s228
      %p234 = scmp.eq.s32.totalorder %s21, 0
      %p235 = por %p233, %p234
      %p236 = scmp.ne.s32.totalorder %s225, %s228
      %p237 = scmp.eq.s32.totalorder %s26, 2
      %p238 = por %p236, %p237
      %p239 = scmp.ne.s32.totalorder %s228, %s229
      %p240 = scmp.eq.s32.totalorder %s26, 0
      %p241 = por %p239, %p240
      %p242 = scmp.ne.s32.totalorder %s228, %s229
      %p243 = scmp.eq.s32.totalorder %s27, 2
      %p244 = por %p242, %p243
      %p246 = scmp.ne.s32.totalorder %s229, %s245
      %p247 = scmp.eq.s32.totalorder %s27, 0
      %p248 = por %p246, %p247
      %p249 = scmp.le.s32.totalorder 1, %s21
      %p250 = scmp.lt.s32.totalorder %s21, 4
      %p251 = pnand %p249, %p250
      %p252 = pneg %p251
      // Predicated region
      $region9: #{forward.1} parent=5 // pred_check
        _
      $region10: #{forward.1} parent=5 // pred_check_branch
        %254 = sbr.rel (%p251) target = $region12
      $region11: #{forward.1} parent=5 // pred_region
        %s255 = ssub.s32 %s21, 1
        // Predicated region
        $region13: #{forward.1} parent=11 // pred_check
          %p256 = pneg %p68
        $region14: #{forward.1} parent=11 // pred_check_branch
          %258 = sbr.rel (%p256) target = $region16
        $region15: #{forward.1} parent=11 // pred_region
          %260 = vsyncadd [#allocation4], 0
          %s261 = sshll.u32 %s1, 4
          %s262 = int_to_ptr.hbm [resolvable:$true] %s261
          %s263 = sshll.u32 [#allocation3], 4
          %s264 = int_to_ptr.vmem [resolvable:$true] %s263
          %269 = dma.hbm_to_vmem [thread:$0]  %s262, 4096, %s264, [#allocation4], 128, 128, 8
        $region16: #{forward.1} parent=11 // pred_fallthru
          _
        // Predicated region
        $region17: #{forward.1} parent=11 // pred_check
          %p270 = pneg %p89
        $region18: #{forward.1} parent=11 // pred_check_branch
          %272 = sbr.rel (%p270) target = $region20
        $region19: #{forward.1} parent=11 // pred_region
          %274 = vsyncadd [#allocation6], 0
          %s275 = sshll.u32 %s2, 4
          %s276 = int_to_ptr.hbm [resolvable:$true] %s275
          %s277 = sshll.u32 [#allocation5], 4
          %s278 = int_to_ptr.vmem [resolvable:$true] %s277
          %283 = dma.hbm_to_vmem [thread:$0]  %s276, 4096, %s278, [#allocation6], 128, 128, 8
        $region20: #{forward.1} parent=11 // pred_fallthru
          _
        // Predicated region
        $region21: #{forward.1} parent=11 // pred_check
          %p284 = pneg %p110
        $region22: #{forward.1} parent=11 // pred_check_branch
          %286 = sbr.rel (%p284) target = $region24
        $region23: #{forward.1} parent=11 // pred_region
          %288 = vsyncadd [#allocation6], 0
          %s289 = sshll.u32 %s3, 4
          %s290 = int_to_ptr.hbm [resolvable:$true] %s289
          %s291 = sshll.u32 [#allocation7], 4
          %s292 = int_to_ptr.vmem [resolvable:$true] %s291
          %297 = dma.hbm_to_vmem [thread:$0]  %s290, 2048, %s292, [#allocation6], 128, 128, 8
        $region24: #{forward.1} parent=11 // pred_fallthru
          _
        // Predicated region
        $region25: #{forward.1} parent=11 // pred_check
          %p298 = pneg %p131
        $region26: #{forward.1} parent=11 // pred_check_branch
          %300 = sbr.rel (%p298) target = $region28
        $region27: #{forward.1} parent=11 // pred_region
          %302 = vsyncadd [#allocation9], 0
          %s303 = sshll.u32 %s4, 4
          %s304 = int_to_ptr.hbm [resolvable:$true] %s303
          %s305 = sshll.u32 [#allocation8], 4
          %s306 = int_to_ptr.vmem [resolvable:$true] %s305
          %311 = dma.hbm_to_vmem [thread:$0]  %s304, 2048, %s306, [#allocation9], 128, 128, 8
        $region28: #{forward.1} parent=11 // pred_fallthru
          _
        // Predicated region
        $region29: #{forward.1} parent=11 // pred_check
          %p312 = pneg %p152
        $region30: #{forward.1} parent=11 // pred_check_branch
          %314 = sbr.rel (%p312) target = $region32
        $region31: #{forward.1} parent=11 // pred_region
          %316 = vsyncadd [#allocation9], 0
          %s317 = sshll.u32 %s5, 4
          %s318 = int_to_ptr.hbm [resolvable:$true] %s317
          %s319 = sshll.u32 [#allocation10], 4
          %s320 = int_to_ptr.vmem [resolvable:$true] %s319
          %325 = dma.hbm_to_vmem [thread:$0]  %s318, 512, %s320, [#allocation9], 64, 64, 4
        $region32: #{forward.1} parent=11 // pred_fallthru
          _
        // Predicated region
        $region33: #{forward.1} parent=11 // pred_check
          %p326 = pneg %p173
        $region34: #{forward.1} parent=11 // pred_check_branch
          %328 = sbr.rel (%p326) target = $region36
        $region35: #{forward.1} parent=11 // pred_region
          %330 = vsyncadd [#allocation12], 0
          %s331 = sshll.u32 %s6, 4
          %s332 = int_to_ptr.hbm [resolvable:$true] %s331
          %s333 = sshll.u32 [#allocation11], 4
          %s334 = int_to_ptr.vmem [resolvable:$true] %s333
          %339 = dma.hbm_to_vmem [thread:$0]  %s332, 1024, %s334, [#allocation12], 128, 128, 8
        $region36: #{forward.1} parent=11 // pred_fallthru
          _
        // Predicated region
        $region37: #{forward.1} parent=11 // pred_check
          %p340 = pneg %p194
        $region38: #{forward.1} parent=11 // pred_check_branch
          %342 = sbr.rel (%p340) target = $region40
        $region39: #{forward.1} parent=11 // pred_region
          %344 = vsyncadd [#allocation12], 0
          %s345 = sshll.u32 %s7, 4
          %s346 = int_to_ptr.hbm [resolvable:$true] %s345
          %s347 = sshll.u32 [#allocation13], 4
          %s348 = int_to_ptr.vmem [resolvable:$true] %s347
          %353 = dma.hbm_to_vmem [thread:$0]  %s346, 1024, %s348, [#allocation12], 128, 128, 8
        $region40: #{forward.1} parent=11 // pred_fallthru
          _
        // Predicated region
        $region41: #{forward.1} parent=11 // pred_check
          %p354 = pneg %p215
        $region42: #{forward.1} parent=11 // pred_check_branch
          %356 = sbr.rel (%p354) target = $region44
        $region43: #{forward.1} parent=11 // pred_region
          _
        $region44: #{forward.1} parent=11 // pred_fallthru
          _
      $region12: #{forward.1} parent=5 // pred_fallthru
        _
      %p357 = scmp.lt.s32.totalorder %s21, 3
      // Predicated region
      $region45: #{forward.1} parent=5 // pred_check
        %p358 = pneg %p357
      $region46: #{forward.1} parent=5 // pred_check_branch
        %360 = sbr.rel (%p358) target = $region48
      $region47: #{forward.1} parent=5 // pred_region
        // Predicated region
        $region49: #{forward.1} parent=47 // pred_check
          %p361 = pneg %p41
        $region50: #{forward.1} parent=47 // pred_check_branch
          %363 = sbr.rel (%p361) target = $region52
        $region51: #{forward.1} parent=47 // pred_region
          %p364 = scmp.lt.s32.totalorder %s21, 2
          %s365 = scalar_select %p364, %s21, 2
          %s366 = smul.addr %s365, 2
          %s367 = scalar_lea.vmem %s0, %s366
        $region52: #{forward.1} parent=47 // pred_fallthru
          _
      $region48: #{forward.1} parent=5 // pred_fallthru
        _
      %p368 = scmp.le.s32.totalorder 1, %s21
      %p369 = scmp.lt.s32.totalorder %s21, 4
      %p370 = pnand %p368, %p369
      %p371 = pneg %p370
      // Predicated region
      $region53: #{forward.1} parent=5 // pred_check
        _
      $region54: #{forward.1} parent=5 // pred_check_branch
        %373 = sbr.rel (%p370) target = $region56
      $region55: #{forward.1} parent=5 // pred_region
        %s374 = ssub.s32 %s21, 1
        // Predicated region
        $region57: #{forward.1} parent=55 // pred_check
          %p375 = pneg %p68
        $region58: #{forward.1} parent=55 // pred_check_branch
          %377 = sbr.rel (%p375) target = $region60
        $region59: #{forward.1} parent=55 // pred_region
          %379 = dma.done [#allocation4], 4096
        $region60: #{forward.1} parent=55 // pred_fallthru
          _
        // Predicated region
        $region61: #{forward.1} parent=55 // pred_check
          %p380 = pneg %p89
        $region62: #{forward.1} parent=55 // pred_check_branch
          %382 = sbr.rel (%p380) target = $region64
        $region63: #{forward.1} parent=55 // pred_region
          %384 = dma.done [#allocation6], 4096
        $region64: #{forward.1} parent=55 // pred_fallthru
          _
        // Predicated region
        $region65: #{forward.1} parent=55 // pred_check
          %p385 = pneg %p110
        $region66: #{forward.1} parent=55 // pred_check_branch
          %387 = sbr.rel (%p385) target = $region68
        $region67: #{forward.1} parent=55 // pred_region
          %389 = dma.done [#allocation6], 2048
        $region68: #{forward.1} parent=55 // pred_fallthru
          _
        // Predicated region
        $region69: #{forward.1} parent=55 // pred_check
          %p390 = pneg %p131
        $region70: #{forward.1} parent=55 // pred_check_branch
          %392 = sbr.rel (%p390) target = $region72
        $region71: #{forward.1} parent=55 // pred_region
          %394 = dma.done [#allocation9], 2048
        $region72: #{forward.1} parent=55 // pred_fallthru
          _
        // Predicated region
        $region73: #{forward.1} parent=55 // pred_check
          %p395 = pneg %p152
        $region74: #{forward.1} parent=55 // pred_check_branch
          %397 = sbr.rel (%p395) target = $region76
        $region75: #{forward.1} parent=55 // pred_region
          %399 = dma.done [#allocation9], 512
        $region76: #{forward.1} parent=55 // pred_fallthru
          _
        // Predicated region
        $region77: #{forward.1} parent=55 // pred_check
          %p400 = pneg %p173
        $region78: #{forward.1} parent=55 // pred_check_branch
          %402 = sbr.rel (%p400) target = $region80
        $region79: #{forward.1} parent=55 // pred_region
          %404 = dma.done [#allocation12], 1024
        $region80: #{forward.1} parent=55 // pred_fallthru
          _
        // Predicated region
        $region81: #{forward.1} parent=55 // pred_check
          %p405 = pneg %p194
        $region82: #{forward.1} parent=55 // pred_check_branch
          %407 = sbr.rel (%p405) target = $region84
        $region83: #{forward.1} parent=55 // pred_region
          %409 = dma.done [#allocation12], 1024
        $region84: #{forward.1} parent=55 // pred_fallthru
          _
        %p410 = scmp.lt.s32.totalorder %s26, 2
        %s411 = scalar_select %p410, %s26, 2
        %s412 = smul.addr %s411, 2
        %s413 = scalar_lea.vmem %s0, %s412
        %p414 = pneg %p47
        %p415 = pneg %p44
        %p416 = pneg %p68
        %p417 = pneg %p65
        %p418 = pneg %p89
        %p419 = pneg %p86
        %p420 = pneg %p110
        %p421 = pneg %p107
        %p422 = pneg %p131
        %p423 = pneg %p128
        %p424 = pneg %p152
        %p425 = pneg %p149
        %p426 = pneg %p173
        %p427 = pneg %p170
        %p428 = pneg %p194
        %p429 = pneg %p191
        %p430 = pneg %p215
        %p431 = pneg %p212
        %p432 = pneg %p241
        %p433 = pneg %p238
        %p434 = scmp.lt.s32.totalorder %s26, 2
        %s435 = scalar_select %p434, %s26, 2
        %s436 = scalar_lea.vmem %s9, %s435
        %p437 = scmp.lt.s32.totalorder %s26, 2
        %s438 = scalar_select %p437, %s26, 2
        %s439 = smul.addr %s438, 2
        %s440 = scalar_lea.vmem %s0, %s439
        %p441 = scmp.lt.s32.totalorder %s26, 2
        %s442 = scalar_select %p441, %s26, 2
        %s443 = scalar_lea.vmem %s9, %s442
        %v444 = vld [vmem:[%s440] sm:$0x3]
        %v445 = vld [vmem:[#allocation3] sm:$0xff]
        %v446 = vld [vmem:[#allocation3 + $0x8] sm:$0xff]
        %v447 = vld [vmem:[#allocation3 + $0x10] sm:$0xff]
        %v448 = vld [vmem:[#allocation3 + $0x18] sm:$0xff]
        %v449 = vld [vmem:[#allocation3 + $0x20] sm:$0xff]
        %v450 = vld [vmem:[#allocation3 + $0x28] sm:$0xff]
        %v451 = vld [vmem:[#allocation3 + $0x30] sm:$0xff]
        %v452 = vld [vmem:[#allocation3 + $0x38] sm:$0xff]
        %v453 = vld [vmem:[#allocation3 + $0x40] sm:$0xff]
        %v454 = vld [vmem:[#allocation3 + $0x48] sm:$0xff]
        %v455 = vld [vmem:[#allocation3 + $0x50] sm:$0xff]
        %v456 = vld [vmem:[#allocation3 + $0x58] sm:$0xff]
        %v457 = vld [vmem:[#allocation3 + $0x60] sm:$0xff]
        %v458 = vld [vmem:[#allocation3 + $0x68] sm:$0xff]
        %v459 = vld [vmem:[#allocation3 + $0x70] sm:$0xff]
        %v460 = vld [vmem:[#allocation3 + $0x78] sm:$0xff]
        %v461 = vld [vmem:[#allocation3 + $0x80] sm:$0xff]
        %v462 = vld [vmem:[#allocation3 + $0x88] sm:$0xff]
        %v463 = vld [vmem:[#allocation3 + $0x90] sm:$0xff]
        %v464 = vld [vmem:[#allocation3 + $0x98] sm:$0xff]
        %v465 = vld [vmem:[#allocation3 + $0xa0] sm:$0xff]
        %v466 = vld [vmem:[#allocation3 + $0xa8] sm:$0xff]
        %v467 = vld [vmem:[#allocation3 + $0xb0] sm:$0xff]
        %v468 = vld [vmem:[#allocation3 + $0xb8] sm:$0xff]
        %v469 = vld [vmem:[#allocation3 + $0xc0] sm:$0xff]
        %v470 = vld [vmem:[#allocation3 + $0xc8] sm:$0xff]
        %v471 = vld [vmem:[#allocation3 + $0xd0] sm:$0xff]
        %v472 = vld [vmem:[#allocation3 + $0xd8] sm:$0xff]
        %v473 = vld [vmem:[#allocation3 + $0xe0] sm:$0xff]
        %v474 = vld [vmem:[#allocation3 + $0xe8] sm:$0xff]
        %v475 = vld [vmem:[#allocation3 + $0xf0] sm:$0xff]
        %v476 = vld [vmem:[#allocation3 + $0xf8] sm:$0xff]
        %478 = vset.pattern.permute.xlu0 0
        %479 = vperm.xlu0 %478, %v445
        %v480 = vpop.permute.xlu0 %479
        %483 = vset.pattern.permute.xlu0 0
        %484 = vperm.xlu0 %483, %v446
        %v485 = vpop.permute.xlu0 %484
        %488 = vset.pattern.permute.xlu0 0
        %489 = vperm.xlu0 %488, %v447
        %v490 = vpop.permute.xlu0 %489
        %493 = vset.pattern.permute.xlu0 0
        %494 = vperm.xlu0 %493, %v448
        %v495 = vpop.permute.xlu0 %494
        %498 = vset.pattern.permute.xlu0 0
        %499 = vperm.xlu0 %498, %v449
        %v500 = vpop.permute.xlu0 %499
        %503 = vset.pattern.permute.xlu0 0
        %504 = vperm.xlu0 %503, %v450
        %v505 = vpop.permute.xlu0 %504
        %508 = vset.pattern.permute.xlu0 0
        %509 = vperm.xlu0 %508, %v451
        %v510 = vpop.permute.xlu0 %509
        %513 = vset.pattern.permute.xlu0 0
        %514 = vperm.xlu0 %513, %v452
        %v515 = vpop.permute.xlu0 %514
        %518 = vset.pattern.permute.xlu0 0
        %519 = vperm.xlu0 %518, %v453
        %v520 = vpop.permute.xlu0 %519
        %523 = vset.pattern.permute.xlu0 0
        %524 = vperm.xlu0 %523, %v454
        %v525 = vpop.permute.xlu0 %524
        %528 = vset.pattern.permute.xlu0 0
        %529 = vperm.xlu0 %528, %v455
        %v530 = vpop.permute.xlu0 %529
        %533 = vset.pattern.permute.xlu0 0
        %534 = vperm.xlu0 %533, %v456
        %v535 = vpop.permute.xlu0 %534
        %538 = vset.pattern.permute.xlu0 0
        %539 = vperm.xlu0 %538, %v457
        %v540 = vpop.permute.xlu0 %539
        %543 = vset.pattern.permute.xlu0 0
        %544 = vperm.xlu0 %543, %v458
        %v545 = vpop.permute.xlu0 %544
        %548 = vset.pattern.permute.xlu0 0
        %549 = vperm.xlu0 %548, %v459
        %v550 = vpop.permute.xlu0 %549
        %553 = vset.pattern.permute.xlu0 0
        %554 = vperm.xlu0 %553, %v460
        %v555 = vpop.permute.xlu0 %554
        %558 = vset.pattern.permute.xlu0 0
        %559 = vperm.xlu0 %558, %v461
        %v560 = vpop.permute.xlu0 %559
        %563 = vset.pattern.permute.xlu0 0
        %564 = vperm.xlu0 %563, %v462
        %v565 = vpop.permute.xlu0 %564
        %568 = vset.pattern.permute.xlu0 0
        %569 = vperm.xlu0 %568, %v463
        %v570 = vpop.permute.xlu0 %569
        %573 = vset.pattern.permute.xlu0 0
        %574 = vperm.xlu0 %573, %v464
        %v575 = vpop.permute.xlu0 %574
        %578 = vset.pattern.permute.xlu0 0
        %579 = vperm.xlu0 %578, %v465
        %v580 = vpop.permute.xlu0 %579
        %583 = vset.pattern.permute.xlu0 0
        %584 = vperm.xlu0 %583, %v466
        %v585 = vpop.permute.xlu0 %584
        %588 = vset.pattern.permute.xlu0 0
        %589 = vperm.xlu0 %588, %v467
        %v590 = vpop.permute.xlu0 %589
        %593 = vset.pattern.permute.xlu0 0
        %594 = vperm.xlu0 %593, %v468
        %v595 = vpop.permute.xlu0 %594
        %598 = vset.pattern.permute.xlu0 0
        %599 = vperm.xlu0 %598, %v469
        %v600 = vpop.permute.xlu0 %599
        %603 = vset.pattern.permute.xlu0 0
        %604 = vperm.xlu0 %603, %v470
        %v605 = vpop.permute.xlu0 %604
        %608 = vset.pattern.permute.xlu0 0
        %609 = vperm.xlu0 %608, %v471
        %v610 = vpop.permute.xlu0 %609
        %613 = vset.pattern.permute.xlu0 0
        %614 = vperm.xlu0 %613, %v472
        %v615 = vpop.permute.xlu0 %614
        %618 = vset.pattern.permute.xlu0 0
        %619 = vperm.xlu0 %618, %v473
        %v620 = vpop.permute.xlu0 %619
        %623 = vset.pattern.permute.xlu0 0
        %624 = vperm.xlu0 %623, %v474
        %v625 = vpop.permute.xlu0 %624
        %628 = vset.pattern.permute.xlu0 0
        %629 = vperm.xlu0 %628, %v475
        %v630 = vpop.permute.xlu0 %629
        %633 = vset.pattern.permute.xlu0 0
        %634 = vperm.xlu0 %633, %v476
        %v635 = vpop.permute.xlu0 %634
        %v637 = vperm.slane %v444, 0
        %v638 = vmul.f32 %v480, %v637
        %v639 = vmul.f32 %v485, %v637
        %v640 = vmul.f32 %v490, %v637
        %v641 = vmul.f32 %v495, %v637
        %v642 = vmul.f32 %v500, %v637
        %v643 = vmul.f32 %v505, %v637
        %v644 = vmul.f32 %v510, %v637
        %v645 = vmul.f32 %v515, %v637
        %v646 = vmul.f32 %v520, %v637
        %v647 = vmul.f32 %v525, %v637
        %v648 = vmul.f32 %v530, %v637
        %v649 = vmul.f32 %v535, %v637
        %v650 = vmul.f32 %v540, %v637
        %v651 = vmul.f32 %v545, %v637
        %v652 = vmul.f32 %v550, %v637
        %v653 = vmul.f32 %v555, %v637
        %v654 = vmul.f32 %v560, %v637
        %v655 = vmul.f32 %v565, %v637
        %v656 = vmul.f32 %v570, %v637
        %v657 = vmul.f32 %v575, %v637
        %v658 = vmul.f32 %v580, %v637
        %v659 = vmul.f32 %v585, %v637
        %v660 = vmul.f32 %v590, %v637
        %v661 = vmul.f32 %v595, %v637
        %v662 = vmul.f32 %v600, %v637
        %v663 = vmul.f32 %v605, %v637
        %v664 = vmul.f32 %v610, %v637
        %v665 = vmul.f32 %v615, %v637
        %v666 = vmul.f32 %v620, %v637
        %v667 = vmul.f32 %v625, %v637
        %v668 = vmul.f32 %v630, %v637
        %v669 = vmul.f32 %v635, %v637
        %670 = vset.pattern.permute.xlu0 1
        %671 = vperm.xlu0 %670, %v445
        %v672 = vpop.permute.xlu0 %671
        %674 = vset.pattern.permute.xlu0 1
        %675 = vperm.xlu0 %674, %v446
        %v676 = vpop.permute.xlu0 %675
        %678 = vset.pattern.permute.xlu0 1
        %679 = vperm.xlu0 %678, %v447
        %v680 = vpop.permute.xlu0 %679
        %682 = vset.pattern.permute.xlu0 1
        %683 = vperm.xlu0 %682, %v448
        %v684 = vpop.permute.xlu0 %683
        %686 = vset.pattern.permute.xlu0 1
        %687 = vperm.xlu0 %686, %v449
        %v688 = vpop.permute.xlu0 %687
        %690 = vset.pattern.permute.xlu0 1
        %691 = vperm.xlu0 %690, %v450
        %v692 = vpop.permute.xlu0 %691
        %694 = vset.pattern.permute.xlu0 1
        %695 = vperm.xlu0 %694, %v451
        %v696 = vpop.permute.xlu0 %695
        %698 = vset.pattern.permute.xlu0 1
        %699 = vperm.xlu0 %698, %v452
        %v700 = vpop.permute.xlu0 %699
        %702 = vset.pattern.permute.xlu0 1
        %703 = vperm.xlu0 %702, %v453
        %v704 = vpop.permute.xlu0 %703
        %706 = vset.pattern.permute.xlu0 1
        %707 = vperm.xlu0 %706, %v454
        %v708 = vpop.permute.xlu0 %707
        %710 = vset.pattern.permute.xlu0 1
        %711 = vperm.xlu0 %710, %v455
        %v712 = vpop.permute.xlu0 %711
        %714 = vset.pattern.permute.xlu0 1
        %715 = vperm.xlu0 %714, %v456
        %v716 = vpop.permute.xlu0 %715
        %718 = vset.pattern.permute.xlu0 1
        %719 = vperm.xlu0 %718, %v457
        %v720 = vpop.permute.xlu0 %719
        %722 = vset.pattern.permute.xlu0 1
        %723 = vperm.xlu0 %722, %v458
        %v724 = vpop.permute.xlu0 %723
        %726 = vset.pattern.permute.xlu0 1
        %727 = vperm.xlu0 %726, %v459
        %v728 = vpop.permute.xlu0 %727
        %730 = vset.pattern.permute.xlu0 1
        %731 = vperm.xlu0 %730, %v460
        %v732 = vpop.permute.xlu0 %731
        %734 = vset.pattern.permute.xlu0 1
        %735 = vperm.xlu0 %734, %v461
        %v736 = vpop.permute.xlu0 %735
        %738 = vset.pattern.permute.xlu0 1
        %739 = vperm.xlu0 %738, %v462
        %v740 = vpop.permute.xlu0 %739
        %742 = vset.pattern.permute.xlu0 1
        %743 = vperm.xlu0 %742, %v463
        %v744 = vpop.permute.xlu0 %743
        %746 = vset.pattern.permute.xlu0 1
        %747 = vperm.xlu0 %746, %v464
        %v748 = vpop.permute.xlu0 %747
        %750 = vset.pattern.permute.xlu0 1
        %751 = vperm.xlu0 %750, %v465
        %v752 = vpop.permute.xlu0 %751
        %754 = vset.pattern.permute.xlu0 1
        %755 = vperm.xlu0 %754, %v466
        %v756 = vpop.permute.xlu0 %755
        %758 = vset.pattern.permute.xlu0 1
        %759 = vperm.xlu0 %758, %v467
        %v760 = vpop.permute.xlu0 %759
        %762 = vset.pattern.permute.xlu0 1
        %763 = vperm.xlu0 %762, %v468
        %v764 = vpop.permute.xlu0 %763
        %766 = vset.pattern.permute.xlu0 1
        %767 = vperm.xlu0 %766, %v469
        %v768 = vpop.permute.xlu0 %767
        %770 = vset.pattern.permute.xlu0 1
        %771 = vperm.xlu0 %770, %v470
        %v772 = vpop.permute.xlu0 %771
        %774 = vset.pattern.permute.xlu0 1
        %775 = vperm.xlu0 %774, %v471
        %v776 = vpop.permute.xlu0 %775
        %778 = vset.pattern.permute.xlu0 1
        %779 = vperm.xlu0 %778, %v472
        %v780 = vpop.permute.xlu0 %779
        %782 = vset.pattern.permute.xlu0 1
        %783 = vperm.xlu0 %782, %v473
        %v784 = vpop.permute.xlu0 %783
        %786 = vset.pattern.permute.xlu0 1
        %787 = vperm.xlu0 %786, %v474
        %v788 = vpop.permute.xlu0 %787
        %790 = vset.pattern.permute.xlu0 1
        %791 = vperm.xlu0 %790, %v475
        %v792 = vpop.permute.xlu0 %791
        %794 = vset.pattern.permute.xlu0 1
        %795 = vperm.xlu0 %794, %v476
        %v796 = vpop.permute.xlu0 %795
        %v798 = vperm.slane %v444, 1
        %v799 = vmul.f32 %v672, %v798
        %v800 = vmul.f32 %v676, %v798
        %v801 = vmul.f32 %v680, %v798
        %v802 = vmul.f32 %v684, %v798
        %v803 = vmul.f32 %v688, %v798
        %v804 = vmul.f32 %v692, %v798
        %v805 = vmul.f32 %v696, %v798
        %v806 = vmul.f32 %v700, %v798
        %v807 = vmul.f32 %v704, %v798
        %v808 = vmul.f32 %v708, %v798
        %v809 = vmul.f32 %v712, %v798
        %v810 = vmul.f32 %v716, %v798
        %v811 = vmul.f32 %v720, %v798
        %v812 = vmul.f32 %v724, %v798
        %v813 = vmul.f32 %v728, %v798
        %v814 = vmul.f32 %v732, %v798
        %v815 = vmul.f32 %v736, %v798
        %v816 = vmul.f32 %v740, %v798
        %v817 = vmul.f32 %v744, %v798
        %v818 = vmul.f32 %v748, %v798
        %v819 = vmul.f32 %v752, %v798
        %v820 = vmul.f32 %v756, %v798
        %v821 = vmul.f32 %v760, %v798
        %v822 = vmul.f32 %v764, %v798
        %v823 = vmul.f32 %v768, %v798
        %v824 = vmul.f32 %v772, %v798
        %v825 = vmul.f32 %v776, %v798
        %v826 = vmul.f32 %v780, %v798
        %v827 = vmul.f32 %v784, %v798
        %v828 = vmul.f32 %v788, %v798
        %v829 = vmul.f32 %v792, %v798
        %v830 = vmul.f32 %v796, %v798
        %v831 = vadd.f32 %v638, %v799
        %v832 = vadd.f32 %v639, %v800
        %v833 = vadd.f32 %v640, %v801
        %v834 = vadd.f32 %v641, %v802
        %v835 = vadd.f32 %v642, %v803
        %v836 = vadd.f32 %v643, %v804
        %v837 = vadd.f32 %v644, %v805
        %v838 = vadd.f32 %v645, %v806
        %v839 = vadd.f32 %v646, %v807
        %v840 = vadd.f32 %v647, %v808
        %v841 = vadd.f32 %v648, %v809
        %v842 = vadd.f32 %v649, %v810
        %v843 = vadd.f32 %v650, %v811
        %v844 = vadd.f32 %v651, %v812
        %v845 = vadd.f32 %v652, %v813
        %v846 = vadd.f32 %v653, %v814
        %v847 = vadd.f32 %v654, %v815
        %v848 = vadd.f32 %v655, %v816
        %v849 = vadd.f32 %v656, %v817
        %v850 = vadd.f32 %v657, %v818
        %v851 = vadd.f32 %v658, %v819
        %v852 = vadd.f32 %v659, %v820
        %v853 = vadd.f32 %v660, %v821
        %v854 = vadd.f32 %v661, %v822
        %v855 = vadd.f32 %v662, %v823
        %v856 = vadd.f32 %v663, %v824
        %v857 = vadd.f32 %v664, %v825
        %v858 = vadd.f32 %v665, %v826
        %v859 = vadd.f32 %v666, %v827
        %v860 = vadd.f32 %v667, %v828
        %v861 = vadd.f32 %v668, %v829
        %v862 = vadd.f32 %v669, %v830
        %v863 = vld [vmem:[#allocation5] sm:$0xff]
        %v864 = vld [vmem:[#allocation5 + $0x8] sm:$0xff]
        %v865 = vld [vmem:[#allocation5 + $0x10] sm:$0xff]
        %v866 = vld [vmem:[#allocation5 + $0x18] sm:$0xff]
        %v867 = vld [vmem:[#allocation5 + $0x20] sm:$0xff]
        %v868 = vld [vmem:[#allocation5 + $0x28] sm:$0xff]
        %v869 = vld [vmem:[#allocation5 + $0x30] sm:$0xff]
        %v870 = vld [vmem:[#allocation5 + $0x38] sm:$0xff]
        %v871 = vld [vmem:[#allocation5 + $0x40] sm:$0xff]
        %v872 = vld [vmem:[#allocation5 + $0x48] sm:$0xff]
        %v873 = vld [vmem:[#allocation5 + $0x50] sm:$0xff]
        %v874 = vld [vmem:[#allocation5 + $0x58] sm:$0xff]
        %v875 = vld [vmem:[#allocation5 + $0x60] sm:$0xff]
        %v876 = vld [vmem:[#allocation5 + $0x68] sm:$0xff]
        %v877 = vld [vmem:[#allocation5 + $0x70] sm:$0xff]
        %v878 = vld [vmem:[#allocation5 + $0x78] sm:$0xff]
        %v879 = vld [vmem:[#allocation5 + $0x80] sm:$0xff]
        %v880 = vld [vmem:[#allocation5 + $0x88] sm:$0xff]
        %v881 = vld [vmem:[#allocation5 + $0x90] sm:$0xff]
        %v882 = vld [vmem:[#allocation5 + $0x98] sm:$0xff]
        %v883 = vld [vmem:[#allocation5 + $0xa0] sm:$0xff]
        %v884 = vld [vmem:[#allocation5 + $0xa8] sm:$0xff]
        %v885 = vld [vmem:[#allocation5 + $0xb0] sm:$0xff]
        %v886 = vld [vmem:[#allocation5 + $0xb8] sm:$0xff]
        %v887 = vld [vmem:[#allocation5 + $0xc0] sm:$0xff]
        %v888 = vld [vmem:[#allocation5 + $0xc8] sm:$0xff]
        %v889 = vld [vmem:[#allocation5 + $0xd0] sm:$0xff]
        %v890 = vld [vmem:[#allocation5 + $0xd8] sm:$0xff]
        %v891 = vld [vmem:[#allocation5 + $0xe0] sm:$0xff]
        %v892 = vld [vmem:[#allocation5 + $0xe8] sm:$0xff]
        %v893 = vld [vmem:[#allocation5 + $0xf0] sm:$0xff]
        %v894 = vld [vmem:[#allocation5 + $0xf8] sm:$0xff]
        %896 = vset.pattern.permute.xlu0 0
        %897 = vperm.xlu0 %896, %v863
        %v898 = vpop.permute.xlu0 %897
        %901 = vset.pattern.permute.xlu0 0
        %902 = vperm.xlu0 %901, %v864
        %v903 = vpop.permute.xlu0 %902
        %906 = vset.pattern.permute.xlu0 0
        %907 = vperm.xlu0 %906, %v865
        %v908 = vpop.permute.xlu0 %907
        %911 = vset.pattern.permute.xlu0 0
        %912 = vperm.xlu0 %911, %v866
        %v913 = vpop.permute.xlu0 %912
        %916 = vset.pattern.permute.xlu0 0
        %917 = vperm.xlu0 %916, %v867
        %v918 = vpop.permute.xlu0 %917
        %921 = vset.pattern.permute.xlu0 0
        %922 = vperm.xlu0 %921, %v868
        %v923 = vpop.permute.xlu0 %922
        %926 = vset.pattern.permute.xlu0 0
        %927 = vperm.xlu0 %926, %v869
        %v928 = vpop.permute.xlu0 %927
        %931 = vset.pattern.permute.xlu0 0
        %932 = vperm.xlu0 %931, %v870
        %v933 = vpop.permute.xlu0 %932
        %936 = vset.pattern.permute.xlu0 0
        %937 = vperm.xlu0 %936, %v871
        %v938 = vpop.permute.xlu0 %937
        %941 = vset.pattern.permute.xlu0 0
        %942 = vperm.xlu0 %941, %v872
        %v943 = vpop.permute.xlu0 %942
        %946 = vset.pattern.permute.xlu0 0
        %947 = vperm.xlu0 %946, %v873
        %v948 = vpop.permute.xlu0 %947
        %951 = vset.pattern.permute.xlu0 0
        %952 = vperm.xlu0 %951, %v874
        %v953 = vpop.permute.xlu0 %952
        %956 = vset.pattern.permute.xlu0 0
        %957 = vperm.xlu0 %956, %v875
        %v958 = vpop.permute.xlu0 %957
        %961 = vset.pattern.permute.xlu0 0
        %962 = vperm.xlu0 %961, %v876
        %v963 = vpop.permute.xlu0 %962
        %966 = vset.pattern.permute.xlu0 0
        %967 = vperm.xlu0 %966, %v877
        %v968 = vpop.permute.xlu0 %967
        %971 = vset.pattern.permute.xlu0 0
        %972 = vperm.xlu0 %971, %v878
        %v973 = vpop.permute.xlu0 %972
        %976 = vset.pattern.permute.xlu0 0
        %977 = vperm.xlu0 %976, %v879
        %v978 = vpop.permute.xlu0 %977
        %981 = vset.pattern.permute.xlu0 0
        %982 = vperm.xlu0 %981, %v880
        %v983 = vpop.permute.xlu0 %982
        %986 = vset.pattern.permute.xlu0 0
        %987 = vperm.xlu0 %986, %v881
        %v988 = vpop.permute.xlu0 %987
        %991 = vset.pattern.permute.xlu0 0
        %992 = vperm.xlu0 %991, %v882
        %v993 = vpop.permute.xlu0 %992
        %996 = vset.pattern.permute.xlu0 0
        %997 = vperm.xlu0 %996, %v883
        %v998 = vpop.permute.xlu0 %997
        %1001 = vset.pattern.permute.xlu0 0
        %1002 = vperm.xlu0 %1001, %v884
        %v1003 = vpop.permute.xlu0 %1002
        %1006 = vset.pattern.permute.xlu0 0
        %1007 = vperm.xlu0 %1006, %v885
        %v1008 = vpop.permute.xlu0 %1007
        %1011 = vset.pattern.permute.xlu0 0
        %1012 = vperm.xlu0 %1011, %v886
        %v1013 = vpop.permute.xlu0 %1012
        %1016 = vset.pattern.permute.xlu0 0
        %1017 = vperm.xlu0 %1016, %v887
        %v1018 = vpop.permute.xlu0 %1017
        %1021 = vset.pattern.permute.xlu0 0
        %1022 = vperm.xlu0 %1021, %v888
        %v1023 = vpop.permute.xlu0 %1022
        %1026 = vset.pattern.permute.xlu0 0
        %1027 = vperm.xlu0 %1026, %v889
        %v1028 = vpop.permute.xlu0 %1027
        %1031 = vset.pattern.permute.xlu0 0
        %1032 = vperm.xlu0 %1031, %v890
        %v1033 = vpop.permute.xlu0 %1032
        %1036 = vset.pattern.permute.xlu0 0
        %1037 = vperm.xlu0 %1036, %v891
        %v1038 = vpop.permute.xlu0 %1037
        %1041 = vset.pattern.permute.xlu0 0
        %1042 = vperm.xlu0 %1041, %v892
        %v1043 = vpop.permute.xlu0 %1042
        %1046 = vset.pattern.permute.xlu0 0
        %1047 = vperm.xlu0 %1046, %v893
        %v1048 = vpop.permute.xlu0 %1047
        %1051 = vset.pattern.permute.xlu0 0
        %1052 = vperm.xlu0 %1051, %v894
        %v1053 = vpop.permute.xlu0 %1052
        %v1055 = vadd.f32 %v831, %v898
        %v1056 = vadd.f32 %v832, %v903
        %v1057 = vadd.f32 %v833, %v908
        %v1058 = vadd.f32 %v834, %v913
        %v1059 = vadd.f32 %v835, %v918
        %v1060 = vadd.f32 %v836, %v923
        %v1061 = vadd.f32 %v837, %v928
        %v1062 = vadd.f32 %v838, %v933
        %v1063 = vadd.f32 %v839, %v938
        %v1064 = vadd.f32 %v840, %v943
        %v1065 = vadd.f32 %v841, %v948
        %v1066 = vadd.f32 %v842, %v953
        %v1067 = vadd.f32 %v843, %v958
        %v1068 = vadd.f32 %v844, %v963
        %v1069 = vadd.f32 %v845, %v968
        %v1070 = vadd.f32 %v846, %v973
        %v1071 = vadd.f32 %v847, %v978
        %v1072 = vadd.f32 %v848, %v983
        %v1073 = vadd.f32 %v849, %v988
        %v1074 = vadd.f32 %v850, %v993
        %v1075 = vadd.f32 %v851, %v998
        %v1076 = vadd.f32 %v852, %v1003
        %v1077 = vadd.f32 %v853, %v1008
        %v1078 = vadd.f32 %v854, %v1013
        %v1079 = vadd.f32 %v855, %v1018
        %v1080 = vadd.f32 %v856, %v1023
        %v1081 = vadd.f32 %v857, %v1028
        %v1082 = vadd.f32 %v858, %v1033
        %v1083 = vadd.f32 %v859, %v1038
        %v1084 = vadd.f32 %v860, %v1043
        %v1085 = vadd.f32 %v861, %v1048
        %v1086 = vadd.f32 %v862, %v1053
        %v1087 = vmax.f32 %v1055, 0.0
        %v1088 = vmax.f32 %v1056, 0.0
        %v1089 = vmax.f32 %v1057, 0.0
        %v1090 = vmax.f32 %v1058, 0.0
        %v1091 = vmax.f32 %v1059, 0.0
        %v1092 = vmax.f32 %v1060, 0.0
        %v1093 = vmax.f32 %v1061, 0.0
        %v1094 = vmax.f32 %v1062, 0.0
        %v1095 = vmax.f32 %v1063, 0.0
        %v1096 = vmax.f32 %v1064, 0.0
        %v1097 = vmax.f32 %v1065, 0.0
        %v1098 = vmax.f32 %v1066, 0.0
        %v1099 = vmax.f32 %v1067, 0.0
        %v1100 = vmax.f32 %v1068, 0.0
        %v1101 = vmax.f32 %v1069, 0.0
        %v1102 = vmax.f32 %v1070, 0.0
        %v1103 = vmax.f32 %v1071, 0.0
        %v1104 = vmax.f32 %v1072, 0.0
        %v1105 = vmax.f32 %v1073, 0.0
        %v1106 = vmax.f32 %v1074, 0.0
        %v1107 = vmax.f32 %v1075, 0.0
        %v1108 = vmax.f32 %v1076, 0.0
        %v1109 = vmax.f32 %v1077, 0.0
        %v1110 = vmax.f32 %v1078, 0.0
        %v1111 = vmax.f32 %v1079, 0.0
        %v1112 = vmax.f32 %v1080, 0.0
        %v1113 = vmax.f32 %v1081, 0.0
        %v1114 = vmax.f32 %v1082, 0.0
        %v1115 = vmax.f32 %v1083, 0.0
        %v1116 = vmax.f32 %v1084, 0.0
        %v1117 = vmax.f32 %v1085, 0.0
        %v1118 = vmax.f32 %v1086, 0.0
        %v1119 = vpack.c.bf16 %v1088, %v1087
        %v1120 = vpack.c.bf16 %v1090, %v1089
        %v1121 = vpack.c.bf16 %v1092, %v1091
        %v1122 = vpack.c.bf16 %v1094, %v1093
        %v1123 = vpack.c.bf16 %v1096, %v1095
        %v1124 = vpack.c.bf16 %v1098, %v1097
        %v1125 = vpack.c.bf16 %v1100, %v1099
        %v1126 = vpack.c.bf16 %v1102, %v1101
        %v1127 = vpack.c.bf16 %v1104, %v1103
        %v1128 = vpack.c.bf16 %v1106, %v1105
        %v1129 = vpack.c.bf16 %v1108, %v1107
        %v1130 = vpack.c.bf16 %v1110, %v1109
        %v1131 = vpack.c.bf16 %v1112, %v1111
        %v1132 = vpack.c.bf16 %v1114, %v1113
        %v1133 = vpack.c.bf16 %v1116, %v1115
        %v1134 = vpack.c.bf16 %v1118, %v1117
        %v1135 = vld [vmem:[#allocation7] sm:$0xff]
        %v1136 = vld [vmem:[#allocation7 + $0x8] sm:$0xff]
        %v1137 = vld [vmem:[#allocation7 + $0x10] sm:$0xff]
        %v1138 = vld [vmem:[#allocation7 + $0x18] sm:$0xff]
        %v1139 = vld [vmem:[#allocation7 + $0x20] sm:$0xff]
        %v1140 = vld [vmem:[#allocation7 + $0x28] sm:$0xff]
        %v1141 = vld [vmem:[#allocation7 + $0x30] sm:$0xff]
        %v1142 = vld [vmem:[#allocation7 + $0x38] sm:$0xff]
        %v1143 = vld [vmem:[#allocation7 + $0x40] sm:$0xff]
        %v1144 = vld [vmem:[#allocation7 + $0x48] sm:$0xff]
        %v1145 = vld [vmem:[#allocation7 + $0x50] sm:$0xff]
        %v1146 = vld [vmem:[#allocation7 + $0x58] sm:$0xff]
        %v1147 = vld [vmem:[#allocation7 + $0x60] sm:$0xff]
        %v1148 = vld [vmem:[#allocation7 + $0x68] sm:$0xff]
        %v1149 = vld [vmem:[#allocation7 + $0x70] sm:$0xff]
        %v1150 = vld [vmem:[#allocation7 + $0x78] sm:$0xff]
        %v1151 = vld [vmem:[#allocation8] sm:$0xff]
        %v1152 = vld [vmem:[#allocation8 + $0x8] sm:$0xff]
        %v1153 = vld [vmem:[#allocation8 + $0x10] sm:$0xff]
        %v1154 = vld [vmem:[#allocation8 + $0x18] sm:$0xff]
        %v1155 = vld [vmem:[#allocation8 + $0x20] sm:$0xff]
        %v1156 = vld [vmem:[#allocation8 + $0x28] sm:$0xff]
        %v1157 = vld [vmem:[#allocation8 + $0x30] sm:$0xff]
        %v1158 = vld [vmem:[#allocation8 + $0x38] sm:$0xff]
        %v1159 = vld [vmem:[#allocation8 + $0x40] sm:$0xff]
        %v1160 = vld [vmem:[#allocation8 + $0x48] sm:$0xff]
        %v1161 = vld [vmem:[#allocation8 + $0x50] sm:$0xff]
        %v1162 = vld [vmem:[#allocation8 + $0x58] sm:$0xff]
        %v1163 = vld [vmem:[#allocation8 + $0x60] sm:$0xff]
        %v1164 = vld [vmem:[#allocation8 + $0x68] sm:$0xff]
        %v1165 = vld [vmem:[#allocation8 + $0x70] sm:$0xff]
        %v1166 = vld [vmem:[#allocation8 + $0x78] sm:$0xff]
        %1168 = vset.pattern.permute.xlu0 0
        %1169 = vperm.xlu0 %1168, %v1151
        %v1170 = vpop.permute.xlu0 %1169
        %1173 = vset.pattern.permute.xlu0 0
        %1174 = vperm.xlu0 %1173, %v1152
        %v1175 = vpop.permute.xlu0 %1174
        %1178 = vset.pattern.permute.xlu0 0
        %1179 = vperm.xlu0 %1178, %v1153
        %v1180 = vpop.permute.xlu0 %1179
        %1183 = vset.pattern.permute.xlu0 0
        %1184 = vperm.xlu0 %1183, %v1154
        %v1185 = vpop.permute.xlu0 %1184
        %1188 = vset.pattern.permute.xlu0 0
        %1189 = vperm.xlu0 %1188, %v1155
        %v1190 = vpop.permute.xlu0 %1189
        %1193 = vset.pattern.permute.xlu0 0
        %1194 = vperm.xlu0 %1193, %v1156
        %v1195 = vpop.permute.xlu0 %1194
        %1198 = vset.pattern.permute.xlu0 0
        %1199 = vperm.xlu0 %1198, %v1157
        %v1200 = vpop.permute.xlu0 %1199
        %1203 = vset.pattern.permute.xlu0 0
        %1204 = vperm.xlu0 %1203, %v1158
        %v1205 = vpop.permute.xlu0 %1204
        %1208 = vset.pattern.permute.xlu0 0
        %1209 = vperm.xlu0 %1208, %v1159
        %v1210 = vpop.permute.xlu0 %1209
        %1213 = vset.pattern.permute.xlu0 0
        %1214 = vperm.xlu0 %1213, %v1160
        %v1215 = vpop.permute.xlu0 %1214
        %1218 = vset.pattern.permute.xlu0 0
        %1219 = vperm.xlu0 %1218, %v1161
        %v1220 = vpop.permute.xlu0 %1219
        %1223 = vset.pattern.permute.xlu0 0
        %1224 = vperm.xlu0 %1223, %v1162
        %v1225 = vpop.permute.xlu0 %1224
        %1228 = vset.pattern.permute.xlu0 0
        %1229 = vperm.xlu0 %1228, %v1163
        %v1230 = vpop.permute.xlu0 %1229
        %1233 = vset.pattern.permute.xlu0 0
        %1234 = vperm.xlu0 %1233, %v1164
        %v1235 = vpop.permute.xlu0 %1234
        %1238 = vset.pattern.permute.xlu0 0
        %1239 = vperm.xlu0 %1238, %v1165
        %v1240 = vpop.permute.xlu0 %1239
        %1243 = vset.pattern.permute.xlu0 0
        %1244 = vperm.xlu0 %1243, %v1166
        %v1245 = vpop.permute.xlu0 %1244
        %v1263 = vunpack.c.l.b16 %v1135
        %v1264 = vunpack.c.h.b16 %v1135
        %v1265 = vunpack.c.l.b16 %v1136
        %v1266 = vunpack.c.h.b16 %v1136
        %v1267 = vunpack.c.l.b16 %v1137
        %v1268 = vunpack.c.h.b16 %v1137
        %v1269 = vunpack.c.l.b16 %v1138
        %v1270 = vunpack.c.h.b16 %v1138
        %v1271 = vunpack.c.l.b16 %v1139
        %v1272 = vunpack.c.h.b16 %v1139
        %v1273 = vunpack.c.l.b16 %v1140
        %v1274 = vunpack.c.h.b16 %v1140
        %v1275 = vunpack.c.l.b16 %v1141
        %v1276 = vunpack.c.h.b16 %v1141
        %v1277 = vunpack.c.l.b16 %v1142
        %v1278 = vunpack.c.h.b16 %v1142
        %v1279 = vunpack.c.l.b16 %v1143
        %v1280 = vunpack.c.h.b16 %v1143
        %v1281 = vunpack.c.l.b16 %v1144
        %v1282 = vunpack.c.h.b16 %v1144
        %v1283 = vunpack.c.l.b16 %v1145
        %v1284 = vunpack.c.h.b16 %v1145
        %v1285 = vunpack.c.l.b16 %v1146
        %v1286 = vunpack.c.h.b16 %v1146
        %v1287 = vunpack.c.l.b16 %v1147
        %v1288 = vunpack.c.h.b16 %v1147
        %v1289 = vunpack.c.l.b16 %v1148
        %v1290 = vunpack.c.h.b16 %v1148
        %v1291 = vunpack.c.l.b16 %v1149
        %v1292 = vunpack.c.h.b16 %v1149
        %v1293 = vunpack.c.l.b16 %v1150
        %v1294 = vunpack.c.h.b16 %v1150
        %v1295 = vpack.c.b16 %v1265, %v1263
        %v1296 = vpack.c.b16 %v1266, %v1264
        %v1297 = vpack.c.b16 %v1269, %v1267
        %v1298 = vpack.c.b16 %v1270, %v1268
        %v1299 = vpack.c.b16 %v1273, %v1271
        %v1300 = vpack.c.b16 %v1274, %v1272
        %v1301 = vpack.c.b16 %v1277, %v1275
        %v1302 = vpack.c.b16 %v1278, %v1276
        %v1303 = vpack.c.b16 %v1281, %v1279
        %v1304 = vpack.c.b16 %v1282, %v1280
        %v1305 = vpack.c.b16 %v1285, %v1283
        %v1306 = vpack.c.b16 %v1286, %v1284
        %v1307 = vpack.c.b16 %v1289, %v1287
        %v1308 = vpack.c.b16 %v1290, %v1288
        %v1309 = vpack.c.b16 %v1293, %v1291
        %v1310 = vpack.c.b16 %v1294, %v1292
        %1327 = vmatpush.bf16.msra.mxu0 %v1126
        %1328 = vmatpush.bf16.msra.mxu0 %v1125
        %1329 = vmatpush.bf16.msra.mxu0 %v1124
        %1330 = vmatpush.bf16.msra.mxu0 %v1123
        %1331 = vmatpush.bf16.msra.mxu0 %v1122
        %1332 = vmatpush.bf16.msra.mxu0 %v1121
        %1333 = vmatpush.bf16.msra.mxu0 %v1120
        %1334 = vmatpush.bf16.msra.mxu0 %v1119
        %1335 = vmatmul.bf16.gmra.mxu0 %v1295
        %v1336 = vpop.f32.mrf.mxu0
        %v1337 = vadd.f32 %v1170, %v1336
        %v1338 = vpop.f32.mrf.mxu0
        %v1339 = vadd.f32 %v1175, %v1338
        %1340 = vmatmul.bf16.gmra.mxu0 %v1297
        %v1341 = vpop.f32.mrf.mxu0
        %v1342 = vadd.f32 %v1180, %v1341
        %v1343 = vpop.f32.mrf.mxu0
        %v1344 = vadd.f32 %v1185, %v1343
        %1345 = vmatmul.bf16.gmra.mxu0 %v1299
        %v1346 = vpop.f32.mrf.mxu0
        %v1347 = vadd.f32 %v1190, %v1346
        %v1348 = vpop.f32.mrf.mxu0
        %v1349 = vadd.f32 %v1195, %v1348
        %1350 = vmatmul.bf16.gmra.mxu0 %v1301
        %v1351 = vpop.f32.mrf.mxu0
        %v1352 = vadd.f32 %v1200, %v1351
        %v1353 = vpop.f32.mrf.mxu0
        %v1354 = vadd.f32 %v1205, %v1353
        %1355 = vmatmul.bf16.gmra.mxu0 %v1303
        %v1356 = vpop.f32.mrf.mxu0
        %v1357 = vadd.f32 %v1210, %v1356
        %v1358 = vpop.f32.mrf.mxu0
        %v1359 = vadd.f32 %v1215, %v1358
        %1360 = vmatmul.bf16.gmra.mxu0 %v1305
        %v1361 = vpop.f32.mrf.mxu0
        %v1362 = vadd.f32 %v1220, %v1361
        %v1363 = vpop.f32.mrf.mxu0
        %v1364 = vadd.f32 %v1225, %v1363
        %1365 = vmatmul.bf16.gmra.mxu0 %v1307
        %v1366 = vpop.f32.mrf.mxu0
        %v1367 = vadd.f32 %v1230, %v1366
        %v1368 = vpop.f32.mrf.mxu0
        %v1369 = vadd.f32 %v1235, %v1368
        %1370 = vmatmul.bf16.gmra.mxu0 %v1309
        %v1371 = vpop.f32.mrf.mxu0
        %v1372 = vadd.f32 %v1240, %v1371
        %v1373 = vpop.f32.mrf.mxu0
        %v1374 = vadd.f32 %v1245, %v1373
        %1375 = vdwg.mxu0
        %1376 = vmatpush.bf16.msra.mxu0 %v1134
        %1377 = vmatpush.bf16.msra.mxu0 %v1133
        %1378 = vmatpush.bf16.msra.mxu0 %v1132
        %1379 = vmatpush.bf16.msra.mxu0 %v1131
        %1380 = vmatpush.bf16.msra.mxu0 %v1130
        %1381 = vmatpush.bf16.msra.mxu0 %v1129
        %1382 = vmatpush.bf16.msra.mxu0 %v1128
        %1383 = vmatpush.bf16.msra.mxu0 %v1127
        %1384 = vmatmul.bf16.gmra.mxu0 %v1296
        %v1385 = vpop.f32.mrf.mxu0
        %v1386 = vadd.f32 %v1337, %v1385
        %v1387 = vpop.f32.mrf.mxu0
        %v1388 = vadd.f32 %v1339, %v1387
        %1389 = vmatmul.bf16.gmra.mxu0 %v1298
        %v1390 = vpop.f32.mrf.mxu0
        %v1391 = vadd.f32 %v1342, %v1390
        %v1392 = vpop.f32.mrf.mxu0
        %v1393 = vadd.f32 %v1344, %v1392
        %1394 = vmatmul.bf16.gmra.mxu0 %v1300
        %v1395 = vpop.f32.mrf.mxu0
        %v1396 = vadd.f32 %v1347, %v1395
        %v1397 = vpop.f32.mrf.mxu0
        %v1398 = vadd.f32 %v1349, %v1397
        %1399 = vmatmul.bf16.gmra.mxu0 %v1302
        %v1400 = vpop.f32.mrf.mxu0
        %v1401 = vadd.f32 %v1352, %v1400
        %v1402 = vpop.f32.mrf.mxu0
        %v1403 = vadd.f32 %v1354, %v1402
        %1404 = vmatmul.bf16.gmra.mxu0 %v1304
        %v1405 = vpop.f32.mrf.mxu0
        %v1406 = vadd.f32 %v1357, %v1405
        %v1407 = vpop.f32.mrf.mxu0
        %v1408 = vadd.f32 %v1359, %v1407
        %1409 = vmatmul.bf16.gmra.mxu0 %v1306
        %v1410 = vpop.f32.mrf.mxu0
        %v1411 = vadd.f32 %v1362, %v1410
        %v1412 = vpop.f32.mrf.mxu0
        %v1413 = vadd.f32 %v1364, %v1412
        %1414 = vmatmul.bf16.gmra.mxu0 %v1308
        %v1415 = vpop.f32.mrf.mxu0
        %v1416 = vadd.f32 %v1367, %v1415
        %v1417 = vpop.f32.mrf.mxu0
        %v1418 = vadd.f32 %v1369, %v1417
        %1419 = vmatmul.bf16.gmra.mxu0 %v1310
        %v1420 = vpop.f32.mrf.mxu0
        %v1421 = vadd.f32 %v1372, %v1420
        %v1422 = vpop.f32.mrf.mxu0
        %v1423 = vadd.f32 %v1374, %v1422
        %1424 = vdwg.mxu0
        %v1425 = vmax.f32 %v1386, 0.0
        %v1426 = vmax.f32 %v1388, 0.0
        %v1427 = vmax.f32 %v1391, 0.0
        %v1428 = vmax.f32 %v1393, 0.0
        %v1429 = vmax.f32 %v1396, 0.0
        %v1430 = vmax.f32 %v1398, 0.0
        %v1431 = vmax.f32 %v1401, 0.0
        %v1432 = vmax.f32 %v1403, 0.0
        %v1433 = vmax.f32 %v1406, 0.0
        %v1434 = vmax.f32 %v1408, 0.0
        %v1435 = vmax.f32 %v1411, 0.0
        %v1436 = vmax.f32 %v1413, 0.0
        %v1437 = vmax.f32 %v1416, 0.0
        %v1438 = vmax.f32 %v1418, 0.0
        %v1439 = vmax.f32 %v1421, 0.0
        %v1440 = vmax.f32 %v1423, 0.0
        %v1441 = vpack.c.bf16 %v1426, %v1425
        %v1442 = vpack.c.bf16 %v1428, %v1427
        %v1443 = vpack.c.bf16 %v1430, %v1429
        %v1444 = vpack.c.bf16 %v1432, %v1431
        %v1445 = vpack.c.bf16 %v1434, %v1433
        %v1446 = vpack.c.bf16 %v1436, %v1435
        %v1447 = vpack.c.bf16 %v1438, %v1437
        %v1448 = vpack.c.bf16 %v1440, %v1439
        %v1449 = vld [vmem:[#allocation10] sm:$0xf]
        %v1450 = vld [vmem:[#allocation10 + $0x4] sm:$0xf]
        %v1451 = vld [vmem:[#allocation10 + $0x8] sm:$0xf]
        %v1452 = vld [vmem:[#allocation10 + $0xc] sm:$0xf]
        %v1453 = vld [vmem:[#allocation10 + $0x10] sm:$0xf]
        %v1454 = vld [vmem:[#allocation10 + $0x14] sm:$0xf]
        %v1455 = vld [vmem:[#allocation10 + $0x18] sm:$0xf]
        %v1456 = vld [vmem:[#allocation10 + $0x1c] sm:$0xf]
        %v1457 = vld [vmem:[#allocation11] sm:$0xff]
        %v1458 = vld [vmem:[#allocation11 + $0x8] sm:$0xff]
        %v1459 = vld [vmem:[#allocation11 + $0x10] sm:$0xff]
        %v1460 = vld [vmem:[#allocation11 + $0x18] sm:$0xff]
        %v1461 = vld [vmem:[#allocation11 + $0x20] sm:$0xff]
        %v1462 = vld [vmem:[#allocation11 + $0x28] sm:$0xff]
        %v1463 = vld [vmem:[#allocation11 + $0x30] sm:$0xff]
        %v1464 = vld [vmem:[#allocation11 + $0x38] sm:$0xff]
        %1466 = vset.pattern.permute.xlu0 0
        %1467 = vperm.xlu0 %1466, %v1457
        %v1468 = vpop.permute.xlu0 %1467
        %1471 = vset.pattern.permute.xlu0 0
        %1472 = vperm.xlu0 %1471, %v1458
        %v1473 = vpop.permute.xlu0 %1472
        %1476 = vset.pattern.permute.xlu0 0
        %1477 = vperm.xlu0 %1476, %v1459
        %v1478 = vpop.permute.xlu0 %1477
        %1481 = vset.pattern.permute.xlu0 0
        %1482 = vperm.xlu0 %1481, %v1460
        %v1483 = vpop.permute.xlu0 %1482
        %1486 = vset.pattern.permute.xlu0 0
        %1487 = vperm.xlu0 %1486, %v1461
        %v1488 = vpop.permute.xlu0 %1487
        %1491 = vset.pattern.permute.xlu0 0
        %1492 = vperm.xlu0 %1491, %v1462
        %v1493 = vpop.permute.xlu0 %1492
        %1496 = vset.pattern.permute.xlu0 0
        %1497 = vperm.xlu0 %1496, %v1463
        %v1498 = vpop.permute.xlu0 %1497
        %1501 = vset.pattern.permute.xlu0 0
        %1502 = vperm.xlu0 %1501, %v1464
        %v1503 = vpop.permute.xlu0 %1502
        %v1513 = vunpack.c.l.b16 %v1449
        %v1514 = vunpack.c.l.b16 %v1450
        %v1515 = vunpack.c.l.b16 %v1451
        %v1516 = vunpack.c.l.b16 %v1452
        %v1517 = vunpack.c.l.b16 %v1453
        %v1518 = vunpack.c.l.b16 %v1454
        %v1519 = vunpack.c.l.b16 %v1455
        %v1520 = vunpack.c.l.b16 %v1456
        %v1521 = vpack.c.b16 %v1514, %v1513
        %v1522 = vpack.c.b16 %v1516, %v1515
        %v1523 = vpack.c.b16 %v1518, %v1517
        %v1524 = vpack.c.b16 %v1520, %v1519
        %1529 = vmatpush.bf16.msra.mxu0 %v1448
        %1530 = vmatpush.bf16.msra.mxu0 %v1447
        %1531 = vmatpush.bf16.msra.mxu0 %v1446
        %1532 = vmatpush.bf16.msra.mxu0 %v1445
        %1533 = vmatpush.bf16.msra.mxu0 %v1444
        %1534 = vmatpush.bf16.msra.mxu0 %v1443
        %1535 = vmatpush.bf16.msra.mxu0 %v1442
        %1536 = vmatpush.bf16.msra.mxu0 %v1441
        %1537 = vmatmul.bf16.gmra.mxu0 %v1521
        %v1538 = vpop.f32.mrf.mxu0
        %v1539 = vadd.f32 %v1468, %v1538
        %v1540 = vpop.f32.mrf.mxu0
        %v1541 = vadd.f32 %v1473, %v1540
        %1542 = vmatmul.bf16.gmra.mxu0 %v1522
        %v1543 = vpop.f32.mrf.mxu0
        %v1544 = vadd.f32 %v1478, %v1543
        %v1545 = vpop.f32.mrf.mxu0
        %v1546 = vadd.f32 %v1483, %v1545
        %1547 = vmatmul.bf16.gmra.mxu0 %v1523
        %v1548 = vpop.f32.mrf.mxu0
        %v1549 = vadd.f32 %v1488, %v1548
        %v1550 = vpop.f32.mrf.mxu0
        %v1551 = vadd.f32 %v1493, %v1550
        %1552 = vmatmul.bf16.gmra.mxu0 %v1524
        %v1553 = vpop.f32.mrf.mxu0
        %v1554 = vadd.f32 %v1498, %v1553
        %v1555 = vpop.f32.mrf.mxu0
        %v1556 = vadd.f32 %v1503, %v1555
        %1557 = vdwg.mxu0
        %v1558 = vmax.f32 %v1539, 0.0
        %v1559 = vmax.f32 %v1541, 0.0
        %v1560 = vmax.f32 %v1544, 0.0
        %v1561 = vmax.f32 %v1546, 0.0
        %v1562 = vmax.f32 %v1549, 0.0
        %v1563 = vmax.f32 %v1551, 0.0
        %v1564 = vmax.f32 %v1554, 0.0
        %v1565 = vmax.f32 %v1556, 0.0
        %v1566 = vld [vmem:[#allocation13] sm:$0xff]
        %v1567 = vld [vmem:[#allocation13 + $0x8] sm:$0xff]
        %v1568 = vld [vmem:[#allocation13 + $0x10] sm:$0xff]
        %v1569 = vld [vmem:[#allocation13 + $0x18] sm:$0xff]
        %v1570 = vld [vmem:[#allocation13 + $0x20] sm:$0xff]
        %v1571 = vld [vmem:[#allocation13 + $0x28] sm:$0xff]
        %v1572 = vld [vmem:[#allocation13 + $0x30] sm:$0xff]
        %v1573 = vld [vmem:[#allocation13 + $0x38] sm:$0xff]
        %1575 = vset.pattern.permute.xlu0 0
        %1576 = vperm.xlu0 %1575, %v1566
        %v1577 = vpop.permute.xlu0 %1576
        %1580 = vset.pattern.permute.xlu0 0
        %1581 = vperm.xlu0 %1580, %v1567
        %v1582 = vpop.permute.xlu0 %1581
        %1585 = vset.pattern.permute.xlu0 0
        %1586 = vperm.xlu0 %1585, %v1568
        %v1587 = vpop.permute.xlu0 %1586
        %1590 = vset.pattern.permute.xlu0 0
        %1591 = vperm.xlu0 %1590, %v1569
        %v1592 = vpop.permute.xlu0 %1591
        %1595 = vset.pattern.permute.xlu0 0
        %1596 = vperm.xlu0 %1595, %v1570
        %v1597 = vpop.permute.xlu0 %1596
        %1600 = vset.pattern.permute.xlu0 0
        %1601 = vperm.xlu0 %1600, %v1571
        %v1602 = vpop.permute.xlu0 %1601
        %1605 = vset.pattern.permute.xlu0 0
        %1606 = vperm.xlu0 %1605, %v1572
        %v1607 = vpop.permute.xlu0 %1606
        %1610 = vset.pattern.permute.xlu0 0
        %1611 = vperm.xlu0 %1610, %v1573
        %v1612 = vpop.permute.xlu0 %1611
        %v1614 = vmul.f32 %v1577, %v1558
        %v1615 = vmul.f32 %v1582, %v1559
        %v1616 = vmul.f32 %v1587, %v1560
        %v1617 = vmul.f32 %v1592, %v1561
        %v1618 = vmul.f32 %v1597, %v1562
        %v1619 = vmul.f32 %v1602, %v1563
        %v1620 = vmul.f32 %v1607, %v1564
        %v1621 = vmul.f32 %v1612, %v1565
        %v1622 = vadd.f32 %v1614, %v1615
        %v1623 = vadd.f32 %v1622, %v1616
        %v1624 = vadd.f32 %v1623, %v1617
        %v1625 = vadd.f32 %v1624, %v1618
        %v1626 = vadd.f32 %v1625, %v1619
        %v1627 = vadd.f32 %v1626, %v1620
        %v1628 = vadd.f32 %v1627, %v1621
        %v1629 = vrot.slane %v1628, 4
        %v1630 = vadd.f32 %v1628, %v1629
        %v1631 = vrot.slane %v1630, 2
        %v1632 = vadd.f32 %v1630, %v1631
        %v1633 = vrot.slane %v1632, 1
        %v1634 = vadd.f32 %v1632, %v1633
        %v1635 = vld [vmem:[#allocation2] sm:$0x1]
        %1637 = vset.pattern.permute.xlu0 0
        %1638 = vperm.xlu0 %1637, %v1635
        %v1639 = vpop.permute.xlu0 %1638
        %v1641 = vperm.slane %v1639, 0
        %v1642 = vadd.f32 %v1634, %v1641
        %v1643 = vsub.f32 0.0, %v1642
        %v1644 = vmul.f32 %v1643, 1.442695
        %v1645 = vpow.pop %v1644
        %v1646 = vadd.f32 %v1645, 1.0
        %v1647 = vrcp.pop %v1646
        %1648 = vst [vmem:[%s443] sm:$0x1] %v1647
        %p1649 = scmp.lt.s32.totalorder %s26, 2
        %s1650 = scalar_select %p1649, %s26, 2
        %s1651 = scalar_lea.vmem %s9, %s1650
        // Predicated region
        $region85: #{forward.1} parent=55 // pred_check
          %p1652 = pneg %p238
        $region86: #{forward.1} parent=55 // pred_check_branch
          %1654 = sbr.rel (%p1652) target = $region88
        $region87: #{forward.1} parent=55 // pred_region
          _
        $region88: #{forward.1} parent=55 // pred_fallthru
          _
      $region56: #{forward.1} parent=5 // pred_fallthru
        _
      %p1655 = scmp.le.s32.totalorder 2, %s21
      // Predicated region
      $region89: #{forward.1} parent=5 // pred_check
        %p1656 = pneg %p1655
      $region90: #{forward.1} parent=5 // pred_check_branch
        %1658 = sbr.rel (%p1656) target = $region92
      $region91: #{forward.1} parent=5 // pred_region
        %s1659 = ssub.s32 %s21, 2
        // Predicated region
        $region93: #{forward.1} parent=91 // pred_check
          %p1660 = pneg %p244
        $region94: #{forward.1} parent=91 // pred_check_branch
          %1662 = sbr.rel (%p1660) target = $region96
        $region95: #{forward.1} parent=91 // pred_region
          %p1663 = scmp.lt.s32.totalorder %s27, 2
          %s1664 = scalar_select %p1663, %s27, 2
          %s1665 = scalar_lea.vmem %s9, %s1664
        $region96: #{forward.1} parent=91 // pred_fallthru
          _
      $region92: #{forward.1} parent=5 // pred_fallthru
        _
    $region6: #{forward.1} parent=1 // loop_footer
      %s25 = sadd.s32 1, %s21
    $region7: #{forward.1} parent=1 // loop_footer_branch
      %20 = sbr.rel target = $region3
    $region8: #{forward.1} parent=1 // loop_exit
      _
    %1666 = vsyncpa [#allocation4], 1
    %s1667 = scalar_lea.sflag [#allocation4], 1
    %1668 = vsyncpa %s1667, 1
    %1669 = vsyncpa [#allocation6], 1
    %1670 = vsyncpa [#allocation9], 1
    %1671 = vsyncpa [#allocation12], 1

</llo_original>
